<compile_context>
chip_gen: v6e
topology: v6e:2x2x1
jax: 0.10.0
libtpu: 0.0.40
codegen_flags: <defaults>
</compile_context>

<pallas_src>
import functools

import jax
import jax.numpy as jnp
from jax.experimental import pallas as pl
from jax.experimental.pallas import tpu as pltpu

MAX_LOGSTD = 10.0


# ------------------------------ helpers ------------------------------

def _vmem_limit_bytes():
    """Generation-aware VMEM budget: ~75% of physical capacity.

    v5e/v6e (128 MiB) -> ~96 MiB, v7x (64 MiB) -> ~48 MiB.  Falls back to the
    conservative v7x number if the query is unavailable.
    """
    cap = 64 * 1024 * 1024
    try:
        info = pltpu.get_tpu_info()
        cap = int(getattr(info, "vmem_capacity_bytes", cap))
    except Exception:
        pass
    return (cap * 3) // 4


def _pick_tile(n, target=512):
    """Largest multiple-of-128 tile <= target dividing n, preferring >= 2 blocks.

    >= 2 row blocks keeps the "parallel" axis shardable across v7x's two
    TensorCores; 128-multiples keep every load/store lane/sublane aligned.
    """
    assert n % 128 == 0, "N (number of nodes) must be a multiple of 128"
    candidates = [t for t in range(128, min(target, n) + 1, 128) if n % t == 0]
    two_plus = [t for t in candidates if n // t >= 2]
    pool = two_plus if two_plus else candidates
    return max(pool) if pool else n


# -------- kernel 1: A_hat @ (X @ W1) with ReLU + layer-2 projection epilogue --------

def _gcn1_fused_kernel(a_ref, x_ref, w1_ref, wcat_ref, o_ref, acc_ref):
    k = pl.program_id(1)

    @pl.when(k == 0)
    def _():
        acc_ref[...] = jnp.zeros_like(acc_ref)

    # Layer-1 feature transform fused into the reduction loop: XW1 never
    # round-trips HBM; recomputing it per row block costs ~F_IN/tm extra flops.
    xw_blk = jnp.dot(
        x_ref[...], w1_ref[...], preferred_element_type=jnp.float32
    ).astype(a_ref.dtype)
    acc_ref[...] += jnp.dot(a_ref[...], xw_blk, preferred_element_type=jnp.float32)

    # Output block index is constant along the (arbitrary) reduction axis, so
    # a last-step-only write is valid.  See module docstring for the invariant.
    @pl.when(k == pl.num_programs(1) - 1)
    def _():
        # In-place ReLU on the accumulator (no extra (tm, hid) temporary),
        # fed straight into the layer-2 feature transform.
        acc_ref[...] = jnp.maximum(acc_ref[...], 0.0)
        o_ref[...] = jnp.dot(
            acc_ref[...].astype(wcat_ref.dtype), wcat_ref[...],
            preferred_element_type=jnp.float32,
        ).astype(o_ref.dtype)


def gcn_layer1_fused(a_hat, x, w1, w_cat, *, tm, tk, vmem_limit):
    """Returns relu(A_hat @ (X @ W1)) @ Wcat as bf16 (pre-aggregation slab of layer 2)."""
    n = a_hat.shape[0]
    f_in = x.shape[1]
    hid = w1.shape[1]
    f_out = w_cat.shape[1]
    assert n % tm == 0 and n % tk == 0
    return pl.pallas_call(
        _gcn1_fused_kernel,
        out_shape=jax.ShapeDtypeStruct((n, f_out), jnp.bfloat16),
        grid=(n // tm, n // tk),
        in_specs=[
            pl.BlockSpec((tm, tk), lambda i, k: (i, k)),      # A_hat tile (streamed)
            pl.BlockSpec((tk, f_in), lambda i, k: (k, 0)),    # X rows (narrow, streamed)
            pl.BlockSpec((f_in, hid), lambda i, k: (0, 0)),   # W1 (resident)
            pl.BlockSpec((hid, f_out), lambda i, k: (0, 0)),  # Wcat = [W_mu|W_logstd] (resident)
        ],
        out_specs=pl.BlockSpec((tm, f_out), lambda i, k: (i, 0)),
        scratch_shapes=[pltpu.VMEM((tm, hid), jnp.float32)],
        compiler_params=pltpu.CompilerParams(
            dimension_semantics=("parallel", "arbitrary"),
            vmem_limit_bytes=vmem_limit,
        ),
    )(a_hat, x, w1, w_cat)


# ---- kernel 2: A_hat @ XW2, fused mu/logstd split + clamp + reparametrization ----

def _gcn2_reparam_kernel(*refs, lat, tk, training, xw_resident):
    if training:
        a_ref, xw_ref, noise_ref, z_ref, mu_ref, ls_ref, acc_ref = refs
    else:
        a_ref, xw_ref, z_ref, mu_ref, ls_ref, acc_ref = refs
        noise_ref = None

    k = pl.program_id(1)

    @pl.when(k == 0)
    def _():
        acc_ref[...] = jnp.zeros_like(acc_ref)

    if xw_resident:
        # Full XW2 slab is resident in VMEM (DMA'd once); slice the current
        # k-block in-kernel.  tk is a multiple of 128, so the slice is
        # sublane/lane aligned.
        off = pl.multiple_of(k * tk, tk)
        xw_blk = xw_ref[pl.ds(off, tk), :]
    else:
        xw_blk = xw_ref[...]
    acc_ref[...] += jnp.dot(a_ref[...], xw_blk, preferred_element_type=jnp.float32)

    @pl.when(k == pl.num_programs(1) - 1)
    def _():
        acc = acc_ref[...]                      # (tm, 2*lat): [mu | logstd]
        mu = acc[:, :lat]                       # lat % 128 == 0 -> lane-aligned split
        ls = jnp.minimum(acc[:, lat:], jnp.float32(MAX_LOGSTD))
        mu_ref[...] = mu.astype(mu_ref.dtype)
        ls_ref[...] = ls.astype(ls_ref.dtype)
        if training:
            # clamp + exp (EUP) + FMA (VALU) fused under the MXU epilogue.
            z_ref[...] = (mu + noise_ref[...] * jnp.exp(ls)).astype(z_ref.dtype)
        else:
            z_ref[...] = mu.astype(z_ref.dtype)


def gcn_layer2_reparam(a_hat, xw_cat, noise, *, lat, training, tm, tk, vmem_limit):
    n = a_hat.shape[0]
    f_cat = xw_cat.shape[1]
    assert f_cat == 2 * lat
    assert lat % 128 == 0, (
        "LAT must be a multiple of 128 so the mu/logstd split stays on a lane-tile "
        "boundary (otherwise the epilogue split forces an XLU shuffle)")
    assert n % tm == 0 and n % tk == 0

    # Keep the XW2 slab fully resident in VMEM (one DMA for the whole grid)
    # when it comfortably fits; otherwise stream (tk, f_cat) blocks.
    xw_bytes = n * f_cat * xw_cat.dtype.itemsize
    xw_resident = 2 * xw_bytes <= vmem_limit // 4  # x2 for double-buffer slack
    if xw_resident:
        xw_spec = pl.BlockSpec((n, f_cat), lambda i, k: (0, 0))
    else:
        xw_spec = pl.BlockSpec((tk, f_cat), lambda i, k: (k, 0))

    row_block = pl.BlockSpec((tm, lat), lambda i, k: (i, 0))
    in_specs = [pl.BlockSpec((tm, tk), lambda i, k: (i, k)), xw_spec]
    args = [a_hat, xw_cat]
    if training:
        in_specs.append(row_block)  # noise is only declared/DMA'd in training mode
        args.append(noise)

    kernel = functools.partial(
        _gcn2_reparam_kernel, lat=lat, tk=tk, training=training,
        xw_resident=xw_resident)

    return pl.pallas_call(
        kernel,
        out_shape=(
            jax.ShapeDtypeStruct((n, lat), jnp.float32),  # z
            jax.ShapeDtypeStruct((n, lat), jnp.float32),  # mu
            jax.ShapeDtypeStruct((n, lat), jnp.float32),  # clamped logstd
        ),
        grid=(n // tm, n // tk),
        in_specs=in_specs,
        out_specs=(row_block, row_block, row_block),
        scratch_shapes=[pltpu.VMEM((tm, f_cat), jnp.float32)],
        compiler_params=pltpu.CompilerParams(
            dimension_semantics=("parallel", "arbitrary"),
            vmem_limit_bytes=vmem_limit,
        ),
    )(*args)


# ------------------------------ VGAE wrapper ------------------------------

def vgae_forward(x, a_hat, params, noise=None, training=True):
    """Mirrors VGAE.forward: returns (z, mu, clamped_logstd)."""
    if training and noise is None:
        raise ValueError("training=True requires the reparametrization noise")
    n = a_hat.shape[0]
    lat = params["w_mu"].shape[1]
    vmem_limit = _vmem_limit_bytes()
    tm = _pick_tile(n)
    tk = tm

    # bf16 MXU inputs with f32 accumulation: the kernels are HBM-bound on
    # A_hat / XW2, so halving the streamed bytes ~doubles throughput at the
    # memory roof (and runs the 2x256^2 MXU at full rate on v6e/v7x).
    cdt = jnp.bfloat16
    a_bf = a_hat.astype(cdt)
    x_bf = x.astype(cdt)
    w1 = params["w1"].astype(cdt)
    # mu / logstd share one aggregation: Wcat = [W_mu | W_logstd].
    w_cat = jnp.concatenate([params["w_mu"], params["w_logstd"]], axis=1).astype(cdt)

    xw2 = gcn_layer1_fused(a_bf, x_bf, w1, w_cat,
                           tm=tm, tk=tk, vmem_limit=vmem_limit)
    z, mu, logstd = gcn_layer2_reparam(a_bf, xw2, noise, lat=lat,
                                       training=training, tm=tm, tk=tk,
                                       vmem_limit=vmem_limit)
    return z, mu, logstd


def kl_loss(mu, logstd):
    # -0.5 * mean(sum(1 + 2*logstd - mu^2 - exp(logstd)^2, axis=1))
    return -0.5 * jnp.mean(
        jnp.sum(1.0 + 2.0 * logstd - mu ** 2 - jnp.exp(logstd) ** 2, axis=1))


# --------------------------------- main -----------------------------------

if __name__ == "__main__":
    key = jax.random.PRNGKey(0)
    k_x, k_adj, k_w1, k_wmu, k_wls, k_noise = jax.random.split(key, 6)

    # 128-multiple dims keep every store unmasked / lane-dense; N=512 gives a
    # 2x2 grid at tm=tk=256, so pipelining and the 2-TC row split both engage.
    N = 512       # nodes
    F_IN = 32     # input features
    HID = 128     # hidden dim
    LAT = 128     # latent dim (2*LAT = 256: full-width MXU output, lane-aligned split)

    # Node features.
    x = jax.random.normal(k_x, (N, F_IN), dtype=jnp.float32)

    # Random symmetric adjacency with self-loops, row-normalized (glue).
    a = (jax.random.uniform(k_adj, (N, N)) < 0.1).astype(jnp.float32)
    a = jnp.maximum(a, a.T)
    a = a + jnp.eye(N, dtype=jnp.float32)
    deg = jnp.sum(a, axis=1, keepdims=True)
    a_hat = a / deg

    # Deterministic parameter init (Glorot-ish scaling).
    params = {
        "w1": jax.random.normal(k_w1, (F_IN, HID), jnp.float32) / jnp.sqrt(F_IN),
        "w_mu": jax.random.normal(k_wmu, (HID, LAT), jnp.float32) / jnp.sqrt(HID),
        "w_logstd": jax.random.normal(k_wls, (HID, LAT), jnp.float32) / jnp.sqrt(HID),
    }

    # Gaussian noise for the reparametrization (torch.randn_like equivalent),
    # passed in so the Pallas result is checkable against the JAX reference.
    # TODO(synk): could be drawn in-kernel via pltpu.prng_seed/stateful_normal
    # to drop this HBM read entirely.
    noise = jax.random.normal(k_noise, (N, LAT), dtype=jnp.float32)

    z, mu, logstd = vgae_forward(x, a_hat, params, noise=noise, training=True)
    jax.block_until_ready((z, mu, logstd))

    # Sanity: plain-f32 JAX reference.  The kernels use bf16 MXU inputs with
    # f32 accumulation, so tolerances are loosened accordingly.
    h_ref = jnp.maximum(a_hat @ (x @ params["w1"]), 0.0)
    mu_ref = a_hat @ (h_ref @ params["w_mu"])
    ls_ref = jnp.minimum(a_hat @ (h_ref @ params["w_logstd"]), MAX_LOGSTD)
    z_ref = mu_ref + noise * jnp.exp(ls_ref)
    assert jnp.allclose(mu, mu_ref, atol=3e-2, rtol=3e-2)
    assert jnp.allclose(logstd, ls_ref, atol=3e-2, rtol=3e-2)
    assert jnp.allclose(z, z_ref, atol=3e-2, rtol=3e-2)

    # Eval path (z == mu): exercises the no-noise, no-noise-DMA epilogue branch.
    z_eval, mu_eval, _ = vgae_forward(x, a_hat, params, training=False)
    jax.block_until_ready((z_eval, mu_eval))
    assert jnp.allclose(z_eval, mu_eval)

    # Exercise the KL loss path as well (plain-JAX glue, tiny reduction).
    _ = jax.block_until_ready(kl_loss(mu, logstd))

    # TODO(synk): GAE.recon_loss / InnerProductDecoder / negative_sampling are not part
    # of VGAE.forward and are left unimplemented here.
    print("KERNEL_OK")
</pallas_src>

<mosaic_0001>
module attributes {stable_mosaic.version = 11 : i64} {
  func.func @_gcn1_fused_kernel(%arg0: i32, %arg1: i32, %arg2: memref<256x256xbf16, #tpu.memory_space<vmem>>, %arg3: memref<256x32xbf16, #tpu.memory_space<vmem>>, %arg4: memref<32x128xbf16, #tpu.memory_space<vmem>>, %arg5: memref<128x256xbf16, #tpu.memory_space<vmem>>, %arg6: memref<256x256xbf16, #tpu.memory_space<vmem>>, %arg7: memref<256x128xf32, #tpu.memory_space<vmem>>) attributes {dimension_semantics = [#tpu.dimension_semantics<parallel>, #tpu.dimension_semantics<arbitrary>], iteration_bounds = array<i64: 2, 2>, scalar_prefetch = 0 : i64, scratch_operands = 1 : i64, tpu.core_type = #tpu.core_type<tc>, window_params = [{transform_indices = @transform_0, window_bounds = array<i64: 256, 256>}, {transform_indices = @transform_1, window_bounds = array<i64: 256, 32>}, {pipeline_mode = #tpu.pipeline_mode<synchronous>, transform_indices = @transform_2, window_bounds = array<i64: 32, 128>}, {pipeline_mode = #tpu.pipeline_mode<synchronous>, transform_indices = @transform_3, window_bounds = array<i64: 128, 256>}, {transform_indices = @transform_4, window_bounds = array<i64: 256, 256>}]} {
    %c0_i32 = arith.constant 0 : i32
    %0 = arith.cmpi eq, %arg1, %c0_i32 : i32
    %1 = arith.extui %0 : i1 to i32
    %c0_i32_0 = arith.constant 0 : i32
    %2 = arith.cmpi ne, %1, %c0_i32_0 : i32
    scf.if %2 {
      %cst_12 = arith.constant 0.000000e+00 : f32
      %15 = vector.broadcast %cst_12 : f32 to vector<256x128xf32>
      %c0_13 = arith.constant 0 : index
      %c0_14 = arith.constant 0 : index
      %16 = vector.load %arg7[%c0_13, %c0_14] : memref<256x128xf32, #tpu.memory_space<vmem>>, vector<256x128xf32>
      tpu.vector_store %arg7[%c0_13, %c0_14], %15 {strides = array<i32>} : memref<256x128xf32, #tpu.memory_space<vmem>>, vector<256x128xf32>,
    } else {
    }
    %c0 = arith.constant 0 : index
    %c0_1 = arith.constant 0 : index
    %3 = vector.load %arg3[%c0, %c0_1] : memref<256x32xbf16, #tpu.memory_space<vmem>>, vector<256x32xbf16>
    %c0_2 = arith.constant 0 : index
    %c0_3 = arith.constant 0 : index
    %4 = vector.load %arg4[%c0_2, %c0_3] : memref<32x128xbf16, #tpu.memory_space<vmem>>, vector<32x128xbf16>
    %cst = arith.constant dense<0.000000e+00> : vector<256x128xf32>
    %5 = tpu.matmul %3, %4, %cst {dimension_numbers = #tpu.dot_dimension_numbers<[1], [0], [0], [1], [0, 0, 1, 1], [], []>} : vector<256x32xbf16>, vector<32x128xbf16>, vector<256x128xf32> -> vector<256x128xf32>
    %6 = arith.truncf %5 : vector<256x128xf32> to vector<256x128xbf16>
    %c0_4 = arith.constant 0 : index
    %c0_5 = arith.constant 0 : index
    %7 = vector.load %arg7[%c0_4, %c0_5] : memref<256x128xf32, #tpu.memory_space<vmem>>, vector<256x128xf32>
    %c0_6 = arith.constant 0 : index
    %c0_7 = arith.constant 0 : index
    %8 = vector.load %arg2[%c0_6, %c0_7] : memref<256x256xbf16, #tpu.memory_space<vmem>>, vector<256x256xbf16>
    %cst_8 = arith.constant dense<0.000000e+00> : vector<256x128xf32>
    %9 = tpu.matmul %8, %6, %cst_8 {dimension_numbers = #tpu.dot_dimension_numbers<[1], [0], [0], [1], [0, 0, 1, 1], [], []>} : vector<256x256xbf16>, vector<256x128xbf16>, vector<256x128xf32> -> vector<256x128xf32>
    %10 = arith.addf %7, %9 : vector<256x128xf32>
    %c0_9 = arith.constant 0 : index
    %c0_10 = arith.constant 0 : index
    %11 = vector.load %arg7[%c0_9, %c0_10] : memref<256x128xf32, #tpu.memory_space<vmem>>, vector<256x128xf32>
    tpu.vector_store %arg7[%c0_9, %c0_10], %10 {strides = array<i32>} : memref<256x128xf32, #tpu.memory_space<vmem>>, vector<256x128xf32>,
    %c1_i32 = arith.constant 1 : i32
    %12 = arith.cmpi eq, %arg1, %c1_i32 : i32
    %13 = arith.extui %12 : i1 to i32
    %c0_i32_11 = arith.constant 0 : i32
    %14 = arith.cmpi ne, %13, %c0_i32_11 : i32
    scf.if %14 {
      %c0_12 = arith.constant 0 : index
      %c0_13 = arith.constant 0 : index
      %15 = vector.load %arg7[%c0_12, %c0_13] : memref<256x128xf32, #tpu.memory_space<vmem>>, vector<256x128xf32>
      %cst_14 = arith.constant 0.000000e+00 : f32
      %16 = vector.broadcast %cst_14 : f32 to vector<256x128xf32>
      %17 = arith.maximumf %15, %16 : vector<256x128xf32>
      %c0_15 = arith.constant 0 : index
      %c0_16 = arith.constant 0 : index
      %18 = vector.load %arg7[%c0_15, %c0_16] : memref<256x128xf32, #tpu.memory_space<vmem>>, vector<256x128xf32>
      tpu.vector_store %arg7[%c0_15, %c0_16], %17 {strides = array<i32>} : memref<256x128xf32, #tpu.memory_space<vmem>>, vector<256x128xf32>,
      %c0_17 = arith.constant 0 : index
      %c0_18 = arith.constant 0 : index
      %19 = vector.load %arg7[%c0_17, %c0_18] : memref<256x128xf32, #tpu.memory_space<vmem>>, vector<256x128xf32>
      %20 = arith.truncf %19 : vector<256x128xf32> to vector<256x128xbf16>
      %c0_19 = arith.constant 0 : index
      %c0_20 = arith.constant 0 : index
      %21 = vector.load %arg5[%c0_19, %c0_20] : memref<128x256xbf16, #tpu.memory_space<vmem>>, vector<128x256xbf16>
      %cst_21 = arith.constant dense<0.000000e+00> : vector<256x256xf32>
      %22 = tpu.matmul %20, %21, %cst_21 {dimension_numbers = #tpu.dot_dimension_numbers<[1], [0], [0], [1], [0, 0, 1, 1], [], []>} : vector<256x128xbf16>, vector<128x256xbf16>, vector<256x256xf32> -> vector<256x256xf32>
      %23 = arith.truncf %22 : vector<256x256xf32> to vector<256x256xbf16>
      %c0_22 = arith.constant 0 : index
      %c0_23 = arith.constant 0 : index
      %24 = vector.load %arg6[%c0_22, %c0_23] : memref<256x256xbf16, #tpu.memory_space<vmem>>, vector<256x256xbf16>
      tpu.vector_store %arg6[%c0_22, %c0_23], %23 {strides = array<i32>} : memref<256x256xbf16, #tpu.memory_space<vmem>>, vector<256x256xbf16>,
    } else {
    }
    return
  }
  func.func @transform_0(%arg0: i32, %arg1: i32) -> (i32, i32) {
    %c0_i32 = arith.constant 0 : i32
    return %arg0, %arg1 : i32, i32
  }
  func.func @transform_1(%arg0: i32, %arg1: i32) -> (i32, i32) {
    %c0_i32 = arith.constant 0 : i32
    %c0_i32_0 = arith.constant 0 : i32
    return %arg1, %c0_i32 : i32, i32
  }
  func.func @transform_2(%arg0: i32, %arg1: i32) -> (i32, i32) {
    %c0_i32 = arith.constant 0 : i32
    %c0_i32_0 = arith.constant 0 : i32
    %c0_i32_1 = arith.constant 0 : i32
    return %c0_i32, %c0_i32_0 : i32, i32
  }
  func.func @transform_3(%arg0: i32, %arg1: i32) -> (i32, i32) {
    %c0_i32 = arith.constant 0 : i32
    %c0_i32_0 = arith.constant 0 : i32
    %c0_i32_1 = arith.constant 0 : i32
    return %c0_i32, %c0_i32_0 : i32, i32
  }
  func.func @transform_4(%arg0: i32, %arg1: i32) -> (i32, i32) {
    %c0_i32 = arith.constant 0 : i32
    %c0_i32_0 = arith.constant 0 : i32
    return %arg0, %c0_i32 : i32, i32
  }
}

</mosaic_0001>

<llo_original>
// kernel: tpu_custom_call.1
$region0: #{tpu_custom_call.1}
  #allocation0 [shape = 'u32[]', space=smem, size = 0x4, offset = 0x4, fixed_abs, tag = 'smem constant byte address 0x4 - core index']
  #allocation1 [shape = 'u32[144,128]{1,0:T(1,128)}', space=vmem, size = 0x12000, scoped, tag = 'internal scratch']
  #allocation2 [shape = 'f32[256,128]{1,0:T(8,128)}', space=vmem, size = 0x20000, scoped, tag = 'scratch operand']
  %s0 = inlined_call_operand.hbm [shape: bf16[512,512], index: 0, kind: input, shape index: {}]
  %s1 = inlined_call_operand.vmem [shape: bf16[512,32], index: 1, kind: input, shape index: {}]
  %s2 = inlined_call_operand.vmem [shape: bf16[32,128], index: 2, kind: input, shape index: {}]
  %s3 = inlined_call_operand.vmem [shape: bf16[128,256], index: 3, kind: input, shape index: {}]
  %s4 = inlined_call_operand.hbm [shape: bf16[512,256], index: 4, kind: output, shape index: {}]
  %s5 = sld [smem:[#allocation0]]
  $region61: #{tpu_custom_call.1} parent=0
    _
  %s7 = ssub.s32 1, %s5
  %s8 = scalar_select 0, %s7, %s5
  $region1: #{tpu_custom_call.1} parent=0
    #allocation3 [shape = 'u8[262144]{0}', space=vmem, size = 0x40000, scoped, tag = 'input window, operand 0']
    #allocation4 [shape = 's32[2]{0}', space=sflag, size = 0x8, scoped, tag = 'scoped memory for tpu_custom_call.1']
    #allocation5 [shape = 's32[2]{0}', space=sflag, size = 0x8, scoped, tag = 'scoped memory for tpu_custom_call.1']
    #allocation6 [shape = 'u8[262144]{0}', space=vmem, size = 0x40000, scoped, tag = 'output window, operand 0']
    %9 = vsyncpa [#allocation4], 0
    %s10 = scalar_lea.sflag [#allocation4], 1
    %11 = vsyncpa %s10, 0
    %12 = vsyncpa [#allocation5], 0
    %s13 = scalar_lea.sflag [#allocation5], 1
    %14 = vsyncpa %s13, 0
    loop: start=0, step=1, limit=6
    $region2: #{tpu_custom_call.1} parent=1 // loop_pre_header
      _
    $region3: #{tpu_custom_call.1} parent=1 // loop_header
      %s16 = sphi 0, %s20
      %p17 = scmp.ge.s32.totalorder %s16, 6
      %s23 = sphi 0, %s35
      %s24 = sphi 0, %s31
      %s25 = sphi 0, %s23
      %s26 = sphi 0, %s24
      %s27 = sphi 0, %s25
      %s28 = sphi 0, %s26
      %s40 = sphi 0, %s42
      %s43 = sphi 0, %s40
      %s44 = sphi 0, %s43
      %s60 = sphi 0, %s44
      %s66 = sphi 0, %s68
      %s69 = sphi 0, %s66
      %s70 = sphi 0, %s69
      %s86 = sphi 0, %s70
      %s90 = sphi 0, %s90
      %s92 = sphi 0, %s90
      %s93 = sphi 0, %s92
      %s107 = sphi 0, %s93
      %s111 = sphi 0, %s111
      %s113 = sphi 0, %s111
      %s114 = sphi 0, %s113
      %s128 = sphi 0, %s114
      %s134 = sphi 0, %s136
      %s137 = sphi 0, %s134
      %s138 = sphi 0, %s137
      %s154 = sphi 0, %s138
    $region4: #{tpu_custom_call.1} parent=1 // loop_header_branch
      %19 = sbr.rel (%p17) target = $region8
    $region5: #{tpu_custom_call.1} parent=1 // loop_body
      %s21 = ssub.s32 %s16, 1
      %s22 = ssub.s32 %s16, 2
      %s29 = sadd.s32 1, %s24
      %p30 = scmp.ge.s32.totalorder %s29, 2
      %s31 = scalar_select %p30, 0, %s29
      %s32 = sadd.s32 1, %s23
      %s33 = scalar_select %p30, %s32, %s23
      %p34 = scmp.ge.s32.totalorder %s33, 2
      %s35 = scalar_select %p34, 0, %s33
      %s36 = ssub.s32 %s23, %s35
      %s37 = ssub.s32 %s24, %s31
      %s38 = sor.u32 %s36, %s37
      %p39 = scmp.eq.s32.totalorder %s38, 0
      %s41 = sadd.s32 %s40, 1
      %s42 = scalar_select %p39, %s40, %s41
      %p45 = pneg %p39
      %p46 = scmp.eq.s32.totalorder %s16, 3
      %p47 = por %p45, %p46
      %p48 = scmp.ne.s32.totalorder %s40, %s43
      %p49 = scmp.eq.s32.totalorder %s16, 0
      %p50 = por %p48, %p49
      %p51 = scmp.ne.s32.totalorder %s40, %s43
      %p52 = scmp.eq.s32.totalorder %s21, 3
      %p53 = por %p51, %p52
      %p54 = scmp.ne.s32.totalorder %s43, %s44
      %p55 = scmp.eq.s32.totalorder %s21, 0
      %p56 = por %p54, %p55
      %p57 = scmp.ne.s32.totalorder %s43, %s44
      %p58 = scmp.eq.s32.totalorder %s22, 3
      %p59 = por %p57, %p58
      %p61 = scmp.ne.s32.totalorder %s44, %s60
      %p62 = scmp.eq.s32.totalorder %s22, 0
      %p63 = por %p61, %p62
      %s64 = ssub.s32 %s24, %s31
      %p65 = scmp.eq.s32.totalorder %s64, 0
      %s67 = sadd.s32 %s66, 1
      %s68 = scalar_select %p65, %s66, %s67
      %p71 = pneg %p65
      %p72 = scmp.eq.s32.totalorder %s16, 3
      %p73 = por %p71, %p72
      %p74 = scmp.ne.s32.totalorder %s66, %s69
      %p75 = scmp.eq.s32.totalorder %s16, 0
      %p76 = por %p74, %p75
      %p77 = scmp.ne.s32.totalorder %s66, %s69
      %p78 = scmp.eq.s32.totalorder %s21, 3
      %p79 = por %p77, %p78
      %p80 = scmp.ne.s32.totalorder %s69, %s70
      %p81 = scmp.eq.s32.totalorder %s21, 0
      %p82 = por %p80, %p81
      %p83 = scmp.ne.s32.totalorder %s69, %s70
      %p84 = scmp.eq.s32.totalorder %s22, 3
      %p85 = por %p83, %p84
      %p87 = scmp.ne.s32.totalorder %s70, %s86
      %p88 = scmp.eq.s32.totalorder %s22, 0
      %p89 = por %p87, %p88
      %s91 = sadd.s32 %s90, 1
      %p94 = scmp.eq.s32.totalorder %s16, 3
      %p95 = scmp.ne.s32.totalorder %s90, %s92
      %p96 = scmp.eq.s32.totalorder %s16, 0
      %p97 = por %p95, %p96
      %p98 = scmp.ne.s32.totalorder %s90, %s92
      %p99 = scmp.eq.s32.totalorder %s21, 3
      %p100 = por %p98, %p99
      %p101 = scmp.ne.s32.totalorder %s92, %s93
      %p102 = scmp.eq.s32.totalorder %s21, 0
      %p103 = por %p101, %p102
      %p104 = scmp.ne.s32.totalorder %s92, %s93
      %p105 = scmp.eq.s32.totalorder %s22, 3
      %p106 = por %p104, %p105
      %p108 = scmp.ne.s32.totalorder %s93, %s107
      %p109 = scmp.eq.s32.totalorder %s22, 0
      %p110 = por %p108, %p109
      %s112 = sadd.s32 %s111, 1
      %p115 = scmp.eq.s32.totalorder %s16, 3
      %p116 = scmp.ne.s32.totalorder %s111, %s113
      %p117 = scmp.eq.s32.totalorder %s16, 0
      %p118 = por %p116, %p117
      %p119 = scmp.ne.s32.totalorder %s111, %s113
      %p120 = scmp.eq.s32.totalorder %s21, 3
      %p121 = por %p119, %p120
      %p122 = scmp.ne.s32.totalorder %s113, %s114
      %p123 = scmp.eq.s32.totalorder %s21, 0
      %p124 = por %p122, %p123
      %p125 = scmp.ne.s32.totalorder %s113, %s114
      %p126 = scmp.eq.s32.totalorder %s22, 3
      %p127 = por %p125, %p126
      %p129 = scmp.ne.s32.totalorder %s114, %s128
      %p130 = scmp.eq.s32.totalorder %s22, 0
      %p131 = por %p129, %p130
      %s132 = ssub.s32 %s23, %s35
      %p133 = scmp.eq.s32.totalorder %s132, 0
      %s135 = sadd.s32 %s134, 1
      %s136 = scalar_select %p133, %s134, %s135
      %p139 = pneg %p133
      %p140 = scmp.eq.s32.totalorder %s16, 3
      %p141 = por %p139, %p140
      %p142 = scmp.ne.s32.totalorder %s134, %s137
      %p143 = scmp.eq.s32.totalorder %s16, 0
      %p144 = por %p142, %p143
      %p145 = scmp.ne.s32.totalorder %s134, %s137
      %p146 = scmp.eq.s32.totalorder %s21, 3
      %p147 = por %p145, %p146
      %p148 = scmp.ne.s32.totalorder %s137, %s138
      %p149 = scmp.eq.s32.totalorder %s21, 0
      %p150 = por %p148, %p149
      %p151 = scmp.ne.s32.totalorder %s137, %s138
      %p152 = scmp.eq.s32.totalorder %s22, 3
      %p153 = por %p151, %p152
      %p155 = scmp.ne.s32.totalorder %s138, %s154
      %p156 = scmp.eq.s32.totalorder %s22, 0
      %p157 = por %p155, %p156
      %p158 = scmp.le.s32.totalorder 1, %s16
      %p159 = scmp.lt.s32.totalorder %s16, 5
      %p160 = pnand %p158, %p159
      %p161 = pneg %p160
      // Predicated region
      $region9: #{tpu_custom_call.1} parent=5 // pred_check
        _
      $region10: #{tpu_custom_call.1} parent=5 // pred_check_branch
        %163 = sbr.rel (%p160) target = $region12
      $region11: #{tpu_custom_call.1} parent=5 // pred_region
        %s164 = ssub.s32 %s16, 1
        // Predicated region
        $region13: #{tpu_custom_call.1} parent=11 // pred_check
          %p165 = pneg %p103
        $region14: #{tpu_custom_call.1} parent=11 // pred_check_branch
          %167 = sbr.rel (%p165) target = $region16
        $region15: #{tpu_custom_call.1} parent=11 // pred_region
          _
        $region16: #{tpu_custom_call.1} parent=11 // pred_fallthru
          _
        // Predicated region
        $region17: #{tpu_custom_call.1} parent=11 // pred_check
          %p168 = pneg %p124
        $region18: #{tpu_custom_call.1} parent=11 // pred_check_branch
          %170 = sbr.rel (%p168) target = $region20
        $region19: #{tpu_custom_call.1} parent=11 // pred_region
          _
        $region20: #{tpu_custom_call.1} parent=11 // pred_fallthru
          _
      $region12: #{tpu_custom_call.1} parent=5 // pred_fallthru
        _
      %p171 = scmp.lt.s32.totalorder %s16, 4
      // Predicated region
      $region21: #{tpu_custom_call.1} parent=5 // pred_check
        %p172 = pneg %p171
      $region22: #{tpu_custom_call.1} parent=5 // pred_check_branch
        %174 = sbr.rel (%p172) target = $region24
      $region23: #{tpu_custom_call.1} parent=5 // pred_region
        // Predicated region
        $region25: #{tpu_custom_call.1} parent=23 // pred_check
          %p175 = pneg %p50
        $region26: #{tpu_custom_call.1} parent=23 // pred_check_branch
          %177 = sbr.rel (%p175) target = $region28
        $region27: #{tpu_custom_call.1} parent=23 // pred_region
          %s178 = sand.u32 %s40, 1
          %s179 = scalar_lea.sflag [#allocation4], %s178
          %s180 = sand.u32 %s40, 1
          %s181 = smul.addr %s180, 256
          %s182 = scalar_lea.vmem [#allocation3], %s181
          %s183 = smul.u32 32, %s23
          %s184 = smul.u32 2, %s24
          %s186 = ssub.s32 4096, 4096
          %187 = vsyncadd %s179, %s186
          %s188 = smul.addr %s183, 4
          %s189 = sadd.s32 %s184, %s188
          %s190 = smul.addr %s189, 64
          %s191 = scalar_lea.hbm %s0, %s190
          %s192 = sshll.u32 %s182, 4
          %s193 = int_to_ptr.vmem [resolvable:$true] %s192
          %198 = dma.hbm_to_vmem [thread:$0]  %s191, 4096, %s193, %s179, 256, 128, 8
        $region28: #{tpu_custom_call.1} parent=23 // pred_fallthru
          _
        // Predicated region
        $region29: #{tpu_custom_call.1} parent=23 // pred_check
          %p199 = pneg %p76
        $region30: #{tpu_custom_call.1} parent=23 // pred_check_branch
          %201 = sbr.rel (%p199) target = $region32
        $region31: #{tpu_custom_call.1} parent=23 // pred_region
          %s202 = smul.u32 32, %s24
          %p203 = scmp.lt.s32.totalorder %s202, 63
          %s204 = scalar_select %p203, %s202, 63
          %s205 = smul.addr %s204, 4
          %s206 = scalar_lea.vmem %s1, %s205
          %s207 = smul.u32 32, %s24
        $region32: #{tpu_custom_call.1} parent=23 // pred_fallthru
          _
      $region24: #{tpu_custom_call.1} parent=5 // pred_fallthru
        _
      %p208 = scmp.le.s32.totalorder 1, %s16
      %p209 = scmp.lt.s32.totalorder %s16, 5
      %p210 = pnand %p208, %p209
      %p211 = pneg %p210
      // Predicated region
      $region33: #{tpu_custom_call.1} parent=5 // pred_check
        _
      $region34: #{tpu_custom_call.1} parent=5 // pred_check_branch
        %213 = sbr.rel (%p210) target = $region36
      $region35: #{tpu_custom_call.1} parent=5 // pred_region
        %s214 = ssub.s32 %s16, 1
        %s215 = sand.u32 %s43, 1
        %s216 = scalar_lea.sflag [#allocation4], %s215
        %s217 = sand.u32 %s43, 1
        %s218 = smul.addr %s217, 256
        %s219 = scalar_lea.vmem [#allocation3], %s218
        // Predicated region
        $region37: #{tpu_custom_call.1} parent=35 // pred_check
          %p220 = pneg %p56
        $region38: #{tpu_custom_call.1} parent=35 // pred_check_branch
          %222 = sbr.rel (%p220) target = $region40
        $region39: #{tpu_custom_call.1} parent=35 // pred_region
          %223 = dma.done %s216, 4096
        $region40: #{tpu_custom_call.1} parent=35 // pred_fallthru
          _
        %s224 = sand.u32 %s43, 1
        %s225 = scalar_lea.sflag [#allocation4], %s224
        %s226 = sand.u32 %s43, 1
        %s227 = smul.addr %s226, 256
        %s228 = scalar_lea.vmem [#allocation3], %s227
        %p229 = pneg %p56
        %p230 = pneg %p53
        %s231 = smul.u32 32, %s26
        %p232 = scmp.lt.s32.totalorder %s231, 63
        %s233 = scalar_select %p232, %s231, 63
        %s234 = smul.addr %s233, 4
        %s235 = scalar_lea.vmem %s1, %s234
        %p236 = pneg %p82
        %p237 = pneg %p79
        %p238 = pneg %p103
        %p239 = pneg %p100
        %p240 = pneg %p124
        %p241 = pneg %p121
        %p242 = pneg %p150
        %p243 = pneg %p147
        %s244 = sand.u32 %s137, 1
        %s245 = scalar_lea.sflag [#allocation5], %s244
        %s246 = sand.u32 %s137, 1
        %s247 = smul.addr %s246, 256
        %s248 = scalar_lea.vmem [#allocation6], %s247
        %s249 = smul.u32 32, %s25
        %s250 = smul.u32 2, %s26
        %s251 = smul.u32 32, %s26
        %p252 = scmp.lt.s32.totalorder %s251, 63
        %s253 = scalar_select %p252, %s251, 63
        %s254 = smul.addr %s253, 4
        %s255 = scalar_lea.vmem %s1, %s254
        %s256 = smul.u32 32, %s26
        %s257 = smul.u32 32, %s25
        %p259 = scmp.eq.s32.totalorder %s26, 0
        // Predicated region
        $region41: #{tpu_custom_call.1} parent=35 // pred_check
          %p260 = pneg %p259
        $region42: #{tpu_custom_call.1} parent=35 // pred_check_branch
          %262 = sbr.rel (%p260) target = $region44
        $region43: #{tpu_custom_call.1} parent=35 // pred_region
          %263 = vst [vmem:[#allocation2] sm:$0xff] 0.0
          %264 = vst [vmem:[#allocation2 + $0x8] sm:$0xff] 0.0
          %265 = vst [vmem:[#allocation2 + $0x10] sm:$0xff] 0.0
          %266 = vst [vmem:[#allocation2 + $0x18] sm:$0xff] 0.0
          %267 = vst [vmem:[#allocation2 + $0x20] sm:$0xff] 0.0
          %268 = vst [vmem:[#allocation2 + $0x28] sm:$0xff] 0.0
          %269 = vst [vmem:[#allocation2 + $0x30] sm:$0xff] 0.0
          %270 = vst [vmem:[#allocation2 + $0x38] sm:$0xff] 0.0
          %271 = vst [vmem:[#allocation2 + $0x40] sm:$0xff] 0.0
          %272 = vst [vmem:[#allocation2 + $0x48] sm:$0xff] 0.0
          %273 = vst [vmem:[#allocation2 + $0x50] sm:$0xff] 0.0
          %274 = vst [vmem:[#allocation2 + $0x58] sm:$0xff] 0.0
          %275 = vst [vmem:[#allocation2 + $0x60] sm:$0xff] 0.0
          %276 = vst [vmem:[#allocation2 + $0x68] sm:$0xff] 0.0
          %277 = vst [vmem:[#allocation2 + $0x70] sm:$0xff] 0.0
          %278 = vst [vmem:[#allocation2 + $0x78] sm:$0xff] 0.0
          %279 = vst [vmem:[#allocation2 + $0x80] sm:$0xff] 0.0
          %280 = vst [vmem:[#allocation2 + $0x88] sm:$0xff] 0.0
          %281 = vst [vmem:[#allocation2 + $0x90] sm:$0xff] 0.0
          %282 = vst [vmem:[#allocation2 + $0x98] sm:$0xff] 0.0
          %283 = vst [vmem:[#allocation2 + $0xa0] sm:$0xff] 0.0
          %284 = vst [vmem:[#allocation2 + $0xa8] sm:$0xff] 0.0
          %285 = vst [vmem:[#allocation2 + $0xb0] sm:$0xff] 0.0
          %286 = vst [vmem:[#allocation2 + $0xb8] sm:$0xff] 0.0
          %287 = vst [vmem:[#allocation2 + $0xc0] sm:$0xff] 0.0
          %288 = vst [vmem:[#allocation2 + $0xc8] sm:$0xff] 0.0
          %289 = vst [vmem:[#allocation2 + $0xd0] sm:$0xff] 0.0
          %290 = vst [vmem:[#allocation2 + $0xd8] sm:$0xff] 0.0
          %291 = vst [vmem:[#allocation2 + $0xe0] sm:$0xff] 0.0
          %292 = vst [vmem:[#allocation2 + $0xe8] sm:$0xff] 0.0
          %293 = vst [vmem:[#allocation2 + $0xf0] sm:$0xff] 0.0
          %294 = vst [vmem:[#allocation2 + $0xf8] sm:$0xff] 0.0
        $region44: #{tpu_custom_call.1} parent=35 // pred_fallthru
          _
        %v295 = vld [vmem:[%s255] sm:$0xf]
        %v296 = vld [vmem:[%s255 + $0x4] sm:$0xf]
        %v297 = vld [vmem:[%s255 + $0x8] sm:$0xf]
        %v298 = vld [vmem:[%s255 + $0xc] sm:$0xf]
        %v299 = vld [vmem:[%s255 + $0x10] sm:$0xf]
        %v300 = vld [vmem:[%s255 + $0x14] sm:$0xf]
        %v301 = vld [vmem:[%s255 + $0x18] sm:$0xf]
        %v302 = vld [vmem:[%s255 + $0x1c] sm:$0xf]
        %v303 = vld [vmem:[%s255 + $0x20] sm:$0xf]
        %v304 = vld [vmem:[%s255 + $0x24] sm:$0xf]
        %v305 = vld [vmem:[%s255 + $0x28] sm:$0xf]
        %v306 = vld [vmem:[%s255 + $0x2c] sm:$0xf]
        %v307 = vld [vmem:[%s255 + $0x30] sm:$0xf]
        %v308 = vld [vmem:[%s255 + $0x34] sm:$0xf]
        %v309 = vld [vmem:[%s255 + $0x38] sm:$0xf]
        %v310 = vld [vmem:[%s255 + $0x3c] sm:$0xf]
        %v311 = vld [vmem:[%s255 + $0x40] sm:$0xf]
        %v312 = vld [vmem:[%s255 + $0x44] sm:$0xf]
        %v313 = vld [vmem:[%s255 + $0x48] sm:$0xf]
        %v314 = vld [vmem:[%s255 + $0x4c] sm:$0xf]
        %v315 = vld [vmem:[%s255 + $0x50] sm:$0xf]
        %v316 = vld [vmem:[%s255 + $0x54] sm:$0xf]
        %v317 = vld [vmem:[%s255 + $0x58] sm:$0xf]
        %v318 = vld [vmem:[%s255 + $0x5c] sm:$0xf]
        %v319 = vld [vmem:[%s255 + $0x60] sm:$0xf]
        %v320 = vld [vmem:[%s255 + $0x64] sm:$0xf]
        %v321 = vld [vmem:[%s255 + $0x68] sm:$0xf]
        %v322 = vld [vmem:[%s255 + $0x6c] sm:$0xf]
        %v323 = vld [vmem:[%s255 + $0x70] sm:$0xf]
        %v324 = vld [vmem:[%s255 + $0x74] sm:$0xf]
        %v325 = vld [vmem:[%s255 + $0x78] sm:$0xf]
        %v326 = vld [vmem:[%s255 + $0x7c] sm:$0xf]
        %v327 = vld [vmem:[%s2] sm:$0xf]
        %v328 = vld [vmem:[%s2 + $0x4] sm:$0xf]
        %v329 = vld [vmem:[%s2 + $0x8] sm:$0xf]
        %v330 = vld [vmem:[%s2 + $0xc] sm:$0xf]
        %v363 = vunpack.c.l.b16 %v295
        %v364 = vunpack.c.l.b16 %v296
        %v365 = vunpack.c.l.b16 %v297
        %v366 = vunpack.c.l.b16 %v298
        %v367 = vunpack.c.l.b16 %v299
        %v368 = vunpack.c.l.b16 %v300
        %v369 = vunpack.c.l.b16 %v301
        %v370 = vunpack.c.l.b16 %v302
        %v371 = vunpack.c.l.b16 %v303
        %v372 = vunpack.c.l.b16 %v304
        %v373 = vunpack.c.l.b16 %v305
        %v374 = vunpack.c.l.b16 %v306
        %v375 = vunpack.c.l.b16 %v307
        %v376 = vunpack.c.l.b16 %v308
        %v377 = vunpack.c.l.b16 %v309
        %v378 = vunpack.c.l.b16 %v310
        %v379 = vunpack.c.l.b16 %v311
        %v380 = vunpack.c.l.b16 %v312
        %v381 = vunpack.c.l.b16 %v313
        %v382 = vunpack.c.l.b16 %v314
        %v383 = vunpack.c.l.b16 %v315
        %v384 = vunpack.c.l.b16 %v316
        %v385 = vunpack.c.l.b16 %v317
        %v386 = vunpack.c.l.b16 %v318
        %v387 = vunpack.c.l.b16 %v319
        %v388 = vunpack.c.l.b16 %v320
        %v389 = vunpack.c.l.b16 %v321
        %v390 = vunpack.c.l.b16 %v322
        %v391 = vunpack.c.l.b16 %v323
        %v392 = vunpack.c.l.b16 %v324
        %v393 = vunpack.c.l.b16 %v325
        %v394 = vunpack.c.l.b16 %v326
        %v395 = vpack.c.b16 %v364, %v363
        %v396 = vpack.c.b16 %v366, %v365
        %v397 = vpack.c.b16 %v368, %v367
        %v398 = vpack.c.b16 %v370, %v369
        %v399 = vpack.c.b16 %v372, %v371
        %v400 = vpack.c.b16 %v374, %v373
        %v401 = vpack.c.b16 %v376, %v375
        %v402 = vpack.c.b16 %v378, %v377
        %v403 = vpack.c.b16 %v380, %v379
        %v404 = vpack.c.b16 %v382, %v381
        %v405 = vpack.c.b16 %v384, %v383
        %v406 = vpack.c.b16 %v386, %v385
        %v407 = vpack.c.b16 %v388, %v387
        %v408 = vpack.c.b16 %v390, %v389
        %v409 = vpack.c.b16 %v392, %v391
        %v410 = vpack.c.b16 %v394, %v393
        %v415 = vunpack.c.l.b16 %v327
        %v416 = vunpack.c.l.b16 %v328
        %v417 = vunpack.c.l.b16 %v329
        %v418 = vunpack.c.l.b16 %v330
        %v419 = vpack.c.b16 %v416, %v415
        %v420 = vpack.c.b16 %v418, %v417
        %vm423 = vcmask 261120
        %v425 = vsel %vm423, %v395, 0
        %v428 = vsel %vm423, %v396, 0
        %v431 = vsel %vm423, %v397, 0
        %v434 = vsel %vm423, %v398, 0
        %v437 = vsel %vm423, %v399, 0
        %v440 = vsel %vm423, %v400, 0
        %v443 = vsel %vm423, %v401, 0
        %v446 = vsel %vm423, %v402, 0
        %v449 = vsel %vm423, %v403, 0
        %v452 = vsel %vm423, %v404, 0
        %v455 = vsel %vm423, %v405, 0
        %v458 = vsel %vm423, %v406, 0
        %v461 = vsel %vm423, %v407, 0
        %v464 = vsel %vm423, %v408, 0
        %v467 = vsel %vm423, %v409, 0
        %v470 = vsel %vm423, %v410, 0
        %472 = vmatprep.subr.bf16.mxu0 0
        %473 = vmatpush1.bf16.msra.mxu0 0
        %474 = vmatprep.subr.bf16.mxu0 0
        %475 = vmatpush1.bf16.msra.mxu0 0
        %476 = vmatprep.subr.bf16.mxu0 0
        %477 = vmatpush1.bf16.msra.mxu0 0
        %478 = vmatprep.subr.bf16.mxu0 0
        %479 = vmatpush1.bf16.msra.mxu0 0
        %480 = vmatprep.subr.bf16.mxu0 0
        %481 = vmatpush1.bf16.msra.mxu0 0
        %482 = vmatprep.subr.bf16.mxu0 0
        %483 = vmatpush1.bf16.msra.mxu0 0
        %484 = vmatprep.subr.bf16.mxu0 0
        %485 = vmatpush1.bf16.msra.mxu0 %v420
        %486 = vmatprep.subr.bf16.mxu0 0
        %487 = vmatpush1.bf16.msra.mxu0 %v419
        %488 = vmatprep.subr.bf16.mxu0 0
        %489 = vmatpush2.bf16.msra.mxu0 0
        %490 = vmatprep.subr.bf16.mxu0 0
        %491 = vmatpush2.bf16.msra.mxu0 0
        %492 = vmatprep.subr.bf16.mxu0 0
        %493 = vmatpush2.bf16.msra.mxu0 0
        %494 = vmatprep.subr.bf16.mxu0 0
        %495 = vmatpush2.bf16.msra.mxu0 0
        %496 = vmatprep.subr.bf16.mxu0 0
        %497 = vmatpush2.bf16.msra.mxu0 0
        %498 = vmatprep.subr.bf16.mxu0 0
        %499 = vmatpush2.bf16.msra.mxu0 0
        %500 = vmatprep.subr.bf16.mxu0 0
        %501 = vmatpush2.bf16.msra.mxu0 0
        %502 = vmatprep.subr.bf16.mxu0 0
        %503 = vmatpush2.bf16.msra.mxu0 0
        %504 = vmatprep.mubr.bf16.mxu0 0
        %505 = vmatmul.mubr.bf16.gmra.mxu0 %v425
        %v506 = vpop.f32.mrf.mxu0
        %v507 = vadd.f32 0.0, %v506
        %v508 = vpop.f32.mrf.mxu0
        %v509 = vpop.f32.mrf.mxu0
        %v510 = vadd.f32 0.0, %v509
        %v511 = vpop.f32.mrf.mxu0
        %512 = vmatprep.mubr.bf16.mxu0 0
        %513 = vmatmul.mubr.bf16.gmra.mxu0 %v428
        %v514 = vpop.f32.mrf.mxu0
        %v515 = vadd.f32 0.0, %v514
        %v516 = vpop.f32.mrf.mxu0
        %v517 = vpop.f32.mrf.mxu0
        %v518 = vadd.f32 0.0, %v517
        %v519 = vpop.f32.mrf.mxu0
        %520 = vmatprep.mubr.bf16.mxu0 0
        %521 = vmatmul.mubr.bf16.gmra.mxu0 %v431
        %v522 = vpop.f32.mrf.mxu0
        %v523 = vadd.f32 0.0, %v522
        %v524 = vpop.f32.mrf.mxu0
        %v525 = vpop.f32.mrf.mxu0
        %v526 = vadd.f32 0.0, %v525
        %v527 = vpop.f32.mrf.mxu0
        %528 = vmatprep.mubr.bf16.mxu0 0
        %529 = vmatmul.mubr.bf16.gmra.mxu0 %v434
        %v530 = vpop.f32.mrf.mxu0
        %v531 = vadd.f32 0.0, %v530
        %v532 = vpop.f32.mrf.mxu0
        %v533 = vpop.f32.mrf.mxu0
        %v534 = vadd.f32 0.0, %v533
        %v535 = vpop.f32.mrf.mxu0
        %536 = vmatprep.mubr.bf16.mxu0 0
        %537 = vmatmul.mubr.bf16.gmra.mxu0 %v437
        %v538 = vpop.f32.mrf.mxu0
        %v539 = vadd.f32 0.0, %v538
        %v540 = vpop.f32.mrf.mxu0
        %v541 = vpop.f32.mrf.mxu0
        %v542 = vadd.f32 0.0, %v541
        %v543 = vpop.f32.mrf.mxu0
        %544 = vmatprep.mubr.bf16.mxu0 0
        %545 = vmatmul.mubr.bf16.gmra.mxu0 %v440
        %v546 = vpop.f32.mrf.mxu0
        %v547 = vadd.f32 0.0, %v546
        %v548 = vpop.f32.mrf.mxu0
        %v549 = vpop.f32.mrf.mxu0
        %v550 = vadd.f32 0.0, %v549
        %v551 = vpop.f32.mrf.mxu0
        %552 = vmatprep.mubr.bf16.mxu0 0
        %553 = vmatmul.mubr.bf16.gmra.mxu0 %v443
        %v554 = vpop.f32.mrf.mxu0
        %v555 = vadd.f32 0.0, %v554
        %v556 = vpop.f32.mrf.mxu0
        %v557 = vpop.f32.mrf.mxu0
        %v558 = vadd.f32 0.0, %v557
        %v559 = vpop.f32.mrf.mxu0
        %560 = vmatprep.mubr.bf16.mxu0 0
        %561 = vmatmul.mubr.bf16.gmra.mxu0 %v446
        %v562 = vpop.f32.mrf.mxu0
        %v563 = vadd.f32 0.0, %v562
        %v564 = vpop.f32.mrf.mxu0
        %v565 = vpop.f32.mrf.mxu0
        %v566 = vadd.f32 0.0, %v565
        %v567 = vpop.f32.mrf.mxu0
        %568 = vmatprep.mubr.bf16.mxu0 0
        %569 = vmatmul.mubr.bf16.gmra.mxu0 %v449
        %v570 = vpop.f32.mrf.mxu0
        %v571 = vadd.f32 0.0, %v570
        %v572 = vpop.f32.mrf.mxu0
        %v573 = vpop.f32.mrf.mxu0
        %v574 = vadd.f32 0.0, %v573
        %v575 = vpop.f32.mrf.mxu0
        %576 = vmatprep.mubr.bf16.mxu0 0
        %577 = vmatmul.mubr.bf16.gmra.mxu0 %v452
        %v578 = vpop.f32.mrf.mxu0
        %v579 = vadd.f32 0.0, %v578
        %v580 = vpop.f32.mrf.mxu0
        %v581 = vpop.f32.mrf.mxu0
        %v582 = vadd.f32 0.0, %v581
        %v583 = vpop.f32.mrf.mxu0
        %584 = vmatprep.mubr.bf16.mxu0 0
        %585 = vmatmul.mubr.bf16.gmra.mxu0 %v455
        %v586 = vpop.f32.mrf.mxu0
        %v587 = vadd.f32 0.0, %v586
        %v588 = vpop.f32.mrf.mxu0
        %v589 = vpop.f32.mrf.mxu0
        %v590 = vadd.f32 0.0, %v589
        %v591 = vpop.f32.mrf.mxu0
        %592 = vmatprep.mubr.bf16.mxu0 0
        %593 = vmatmul.mubr.bf16.gmra.mxu0 %v458
        %v594 = vpop.f32.mrf.mxu0
        %v595 = vadd.f32 0.0, %v594
        %v596 = vpop.f32.mrf.mxu0
        %v597 = vpop.f32.mrf.mxu0
        %v598 = vadd.f32 0.0, %v597
        %v599 = vpop.f32.mrf.mxu0
        %600 = vmatprep.mubr.bf16.mxu0 0
        %601 = vmatmul.mubr.bf16.gmra.mxu0 %v461
        %v602 = vpop.f32.mrf.mxu0
        %v603 = vadd.f32 0.0, %v602
        %v604 = vpop.f32.mrf.mxu0
        %v605 = vpop.f32.mrf.mxu0
        %v606 = vadd.f32 0.0, %v605
        %v607 = vpop.f32.mrf.mxu0
        %608 = vmatprep.mubr.bf16.mxu0 0
        %609 = vmatmul.mubr.bf16.gmra.mxu0 %v464
        %v610 = vpop.f32.mrf.mxu0
        %v611 = vadd.f32 0.0, %v610
        %v612 = vpop.f32.mrf.mxu0
        %v613 = vpop.f32.mrf.mxu0
        %v614 = vadd.f32 0.0, %v613
        %v615 = vpop.f32.mrf.mxu0
        %616 = vmatprep.mubr.bf16.mxu0 0
        %617 = vmatmul.mubr.bf16.gmra.mxu0 %v467
        %v618 = vpop.f32.mrf.mxu0
        %v619 = vadd.f32 0.0, %v618
        %v620 = vpop.f32.mrf.mxu0
        %v621 = vpop.f32.mrf.mxu0
        %v622 = vadd.f32 0.0, %v621
        %v623 = vpop.f32.mrf.mxu0
        %624 = vmatprep.mubr.bf16.mxu0 0
        %625 = vmatmul.mubr.bf16.gmra.mxu0 %v470
        %v626 = vpop.f32.mrf.mxu0
        %v627 = vadd.f32 0.0, %v626
        %v628 = vpop.f32.mrf.mxu0
        %v629 = vpop.f32.mrf.mxu0
        %v630 = vadd.f32 0.0, %v629
        %v631 = vpop.f32.mrf.mxu0
        %632 = vdwg.mxu0
        %v633 = vpack.c.bf16 %v510, %v507
        %v634 = vpack.c.bf16 %v518, %v515
        %v635 = vpack.c.bf16 %v526, %v523
        %v636 = vpack.c.bf16 %v534, %v531
        %v637 = vpack.c.bf16 %v542, %v539
        %v638 = vpack.c.bf16 %v550, %v547
        %v639 = vpack.c.bf16 %v558, %v555
        %v640 = vpack.c.bf16 %v566, %v563
        %v641 = vpack.c.bf16 %v574, %v571
        %v642 = vpack.c.bf16 %v582, %v579
        %v643 = vpack.c.bf16 %v590, %v587
        %v644 = vpack.c.bf16 %v598, %v595
        %v645 = vpack.c.bf16 %v606, %v603
        %v646 = vpack.c.bf16 %v614, %v611
        %v647 = vpack.c.bf16 %v622, %v619
        %v648 = vpack.c.bf16 %v630, %v627
        %v649 = vld [vmem:[#allocation2] sm:$0xff]
        %v650 = vld [vmem:[#allocation2 + $0x8] sm:$0xff]
        %v651 = vld [vmem:[#allocation2 + $0x10] sm:$0xff]
        %v652 = vld [vmem:[#allocation2 + $0x18] sm:$0xff]
        %v653 = vld [vmem:[#allocation2 + $0x20] sm:$0xff]
        %v654 = vld [vmem:[#allocation2 + $0x28] sm:$0xff]
        %v655 = vld [vmem:[#allocation2 + $0x30] sm:$0xff]
        %v656 = vld [vmem:[#allocation2 + $0x38] sm:$0xff]
        %v657 = vld [vmem:[#allocation2 + $0x40] sm:$0xff]
        %v658 = vld [vmem:[#allocation2 + $0x48] sm:$0xff]
        %v659 = vld [vmem:[#allocation2 + $0x50] sm:$0xff]
        %v660 = vld [vmem:[#allocation2 + $0x58] sm:$0xff]
        %v661 = vld [vmem:[#allocation2 + $0x60] sm:$0xff]
        %v662 = vld [vmem:[#allocation2 + $0x68] sm:$0xff]
        %v663 = vld [vmem:[#allocation2 + $0x70] sm:$0xff]
        %v664 = vld [vmem:[#allocation2 + $0x78] sm:$0xff]
        %v665 = vld [vmem:[#allocation2 + $0x80] sm:$0xff]
        %v666 = vld [vmem:[#allocation2 + $0x88] sm:$0xff]
        %v667 = vld [vmem:[#allocation2 + $0x90] sm:$0xff]
        %v668 = vld [vmem:[#allocation2 + $0x98] sm:$0xff]
        %v669 = vld [vmem:[#allocation2 + $0xa0] sm:$0xff]
        %v670 = vld [vmem:[#allocation2 + $0xa8] sm:$0xff]
        %v671 = vld [vmem:[#allocation2 + $0xb0] sm:$0xff]
        %v672 = vld [vmem:[#allocation2 + $0xb8] sm:$0xff]
        %v673 = vld [vmem:[#allocation2 + $0xc0] sm:$0xff]
        %v674 = vld [vmem:[#allocation2 + $0xc8] sm:$0xff]
        %v675 = vld [vmem:[#allocation2 + $0xd0] sm:$0xff]
        %v676 = vld [vmem:[#allocation2 + $0xd8] sm:$0xff]
        %v677 = vld [vmem:[#allocation2 + $0xe0] sm:$0xff]
        %v678 = vld [vmem:[#allocation2 + $0xe8] sm:$0xff]
        %v679 = vld [vmem:[#allocation2 + $0xf0] sm:$0xff]
        %v680 = vld [vmem:[#allocation2 + $0xf8] sm:$0xff]
        %v681 = vld [vmem:[%s219] sm:$0xff]
        %v682 = vld [vmem:[%s219 + $0x8] sm:$0xff]
        %v683 = vld [vmem:[%s219 + $0x10] sm:$0xff]
        %v684 = vld [vmem:[%s219 + $0x18] sm:$0xff]
        %v685 = vld [vmem:[%s219 + $0x20] sm:$0xff]
        %v686 = vld [vmem:[%s219 + $0x28] sm:$0xff]
        %v687 = vld [vmem:[%s219 + $0x30] sm:$0xff]
        %v688 = vld [vmem:[%s219 + $0x38] sm:$0xff]
        %v689 = vld [vmem:[%s219 + $0x40] sm:$0xff]
        %v690 = vld [vmem:[%s219 + $0x48] sm:$0xff]
        %v691 = vld [vmem:[%s219 + $0x50] sm:$0xff]
        %v692 = vld [vmem:[%s219 + $0x58] sm:$0xff]
        %v693 = vld [vmem:[%s219 + $0x60] sm:$0xff]
        %v694 = vld [vmem:[%s219 + $0x68] sm:$0xff]
        %v695 = vld [vmem:[%s219 + $0x70] sm:$0xff]
        %v696 = vld [vmem:[%s219 + $0x78] sm:$0xff]
        %v697 = vld [vmem:[%s219 + $0x80] sm:$0xff]
        %v698 = vld [vmem:[%s219 + $0x88] sm:$0xff]
        %v699 = vld [vmem:[%s219 + $0x90] sm:$0xff]
        %v700 = vld [vmem:[%s219 + $0x98] sm:$0xff]
        %v701 = vld [vmem:[%s219 + $0xa0] sm:$0xff]
        %v702 = vld [vmem:[%s219 + $0xa8] sm:$0xff]
        %v703 = vld [vmem:[%s219 + $0xb0] sm:$0xff]
        %v704 = vld [vmem:[%s219 + $0xb8] sm:$0xff]
        %v705 = vld [vmem:[%s219 + $0xc0] sm:$0xff]
        %v706 = vld [vmem:[%s219 + $0xc8] sm:$0xff]
        %v707 = vld [vmem:[%s219 + $0xd0] sm:$0xff]
        %v708 = vld [vmem:[%s219 + $0xd8] sm:$0xff]
        %v709 = vld [vmem:[%s219 + $0xe0] sm:$0xff]
        %v710 = vld [vmem:[%s219 + $0xe8] sm:$0xff]
        %v711 = vld [vmem:[%s219 + $0xf0] sm:$0xff]
        %v712 = vld [vmem:[%s219 + $0xf8] sm:$0xff]
        %v745 = vunpack.c.l.b16 %v681
        %v746 = vunpack.c.h.b16 %v681
        %v747 = vunpack.c.l.b16 %v682
        %v748 = vunpack.c.h.b16 %v682
        %v749 = vunpack.c.l.b16 %v683
        %v750 = vunpack.c.h.b16 %v683
        %v751 = vunpack.c.l.b16 %v684
        %v752 = vunpack.c.h.b16 %v684
        %v753 = vunpack.c.l.b16 %v685
        %v754 = vunpack.c.h.b16 %v685
        %v755 = vunpack.c.l.b16 %v686
        %v756 = vunpack.c.h.b16 %v686
        %v757 = vunpack.c.l.b16 %v687
        %v758 = vunpack.c.h.b16 %v687
        %v759 = vunpack.c.l.b16 %v688
        %v760 = vunpack.c.h.b16 %v688
        %v761 = vunpack.c.l.b16 %v689
        %v762 = vunpack.c.h.b16 %v689
        %v763 = vunpack.c.l.b16 %v690
        %v764 = vunpack.c.h.b16 %v690
        %v765 = vunpack.c.l.b16 %v691
        %v766 = vunpack.c.h.b16 %v691
        %v767 = vunpack.c.l.b16 %v692
        %v768 = vunpack.c.h.b16 %v692
        %v769 = vunpack.c.l.b16 %v693
        %v770 = vunpack.c.h.b16 %v693
        %v771 = vunpack.c.l.b16 %v694
        %v772 = vunpack.c.h.b16 %v694
        %v773 = vunpack.c.l.b16 %v695
        %v774 = vunpack.c.h.b16 %v695
        %v775 = vunpack.c.l.b16 %v696
        %v776 = vunpack.c.h.b16 %v696
        %v777 = vunpack.c.l.b16 %v697
        %v778 = vunpack.c.h.b16 %v697
        %v779 = vunpack.c.l.b16 %v698
        %v780 = vunpack.c.h.b16 %v698
        %v781 = vunpack.c.l.b16 %v699
        %v782 = vunpack.c.h.b16 %v699
        %v783 = vunpack.c.l.b16 %v700
        %v784 = vunpack.c.h.b16 %v700
        %v785 = vunpack.c.l.b16 %v701
        %v786 = vunpack.c.h.b16 %v701
        %v787 = vunpack.c.l.b16 %v702
        %v788 = vunpack.c.h.b16 %v702
        %v789 = vunpack.c.l.b16 %v703
        %v790 = vunpack.c.h.b16 %v703
        %v791 = vunpack.c.l.b16 %v704
        %v792 = vunpack.c.h.b16 %v704
        %v793 = vunpack.c.l.b16 %v705
        %v794 = vunpack.c.h.b16 %v705
        %v795 = vunpack.c.l.b16 %v706
        %v796 = vunpack.c.h.b16 %v706
        %v797 = vunpack.c.l.b16 %v707
        %v798 = vunpack.c.h.b16 %v707
        %v799 = vunpack.c.l.b16 %v708
        %v800 = vunpack.c.h.b16 %v708
        %v801 = vunpack.c.l.b16 %v709
        %v802 = vunpack.c.h.b16 %v709
        %v803 = vunpack.c.l.b16 %v710
        %v804 = vunpack.c.h.b16 %v710
        %v805 = vunpack.c.l.b16 %v711
        %v806 = vunpack.c.h.b16 %v711
        %v807 = vunpack.c.l.b16 %v712
        %v808 = vunpack.c.h.b16 %v712
        %v809 = vpack.c.b16 %v747, %v745
        %v810 = vpack.c.b16 %v748, %v746
        %v811 = vpack.c.b16 %v751, %v749
        %v812 = vpack.c.b16 %v752, %v750
        %v813 = vpack.c.b16 %v755, %v753
        %v814 = vpack.c.b16 %v756, %v754
        %v815 = vpack.c.b16 %v759, %v757
        %v816 = vpack.c.b16 %v760, %v758
        %v817 = vpack.c.b16 %v763, %v761
        %v818 = vpack.c.b16 %v764, %v762
        %v819 = vpack.c.b16 %v767, %v765
        %v820 = vpack.c.b16 %v768, %v766
        %v821 = vpack.c.b16 %v771, %v769
        %v822 = vpack.c.b16 %v772, %v770
        %v823 = vpack.c.b16 %v775, %v773
        %v824 = vpack.c.b16 %v776, %v774
        %v825 = vpack.c.b16 %v779, %v777
        %v826 = vpack.c.b16 %v780, %v778
        %v827 = vpack.c.b16 %v783, %v781
        %v828 = vpack.c.b16 %v784, %v782
        %v829 = vpack.c.b16 %v787, %v785
        %v830 = vpack.c.b16 %v788, %v786
        %v831 = vpack.c.b16 %v791, %v789
        %v832 = vpack.c.b16 %v792, %v790
        %v833 = vpack.c.b16 %v795, %v793
        %v834 = vpack.c.b16 %v796, %v794
        %v835 = vpack.c.b16 %v799, %v797
        %v836 = vpack.c.b16 %v800, %v798
        %v837 = vpack.c.b16 %v803, %v801
        %v838 = vpack.c.b16 %v804, %v802
        %v839 = vpack.c.b16 %v807, %v805
        %v840 = vpack.c.b16 %v808, %v806
        %873 = vmatprep.subr.bf16.mxu0 0
        %874 = vmatpush1.bf16.msra.mxu0 %v640
        %875 = vmatprep.subr.bf16.mxu0 0
        %876 = vmatpush1.bf16.msra.mxu0 %v639
        %877 = vmatprep.subr.bf16.mxu0 0
        %878 = vmatpush1.bf16.msra.mxu0 %v638
        %879 = vmatprep.subr.bf16.mxu0 0
        %880 = vmatpush1.bf16.msra.mxu0 %v637
        %881 = vmatprep.subr.bf16.mxu0 0
        %882 = vmatpush1.bf16.msra.mxu0 %v636
        %883 = vmatprep.subr.bf16.mxu0 0
        %884 = vmatpush1.bf16.msra.mxu0 %v635
        %885 = vmatprep.subr.bf16.mxu0 0
        %886 = vmatpush1.bf16.msra.mxu0 %v634
        %887 = vmatprep.subr.bf16.mxu0 0
        %888 = vmatpush1.bf16.msra.mxu0 %v633
        %889 = vmatprep.subr.bf16.mxu0 0
        %890 = vmatpush2.bf16.msra.mxu0 %v648
        %891 = vmatprep.subr.bf16.mxu0 0
        %892 = vmatpush2.bf16.msra.mxu0 %v647
        %893 = vmatprep.subr.bf16.mxu0 0
        %894 = vmatpush2.bf16.msra.mxu0 %v646
        %895 = vmatprep.subr.bf16.mxu0 0
        %896 = vmatpush2.bf16.msra.mxu0 %v645
        %897 = vmatprep.subr.bf16.mxu0 0
        %898 = vmatpush2.bf16.msra.mxu0 %v644
        %899 = vmatprep.subr.bf16.mxu0 0
        %900 = vmatpush2.bf16.msra.mxu0 %v643
        %901 = vmatprep.subr.bf16.mxu0 0
        %902 = vmatpush2.bf16.msra.mxu0 %v642
        %903 = vmatprep.subr.bf16.mxu0 0
        %904 = vmatpush2.bf16.msra.mxu0 %v641
        %905 = vmatprep.mubr.bf16.mxu0 %v810
        %906 = vmatmul.mubr.bf16.gmra.mxu0 %v809
        %v907 = vpop.f32.mrf.mxu0
        %v908 = vadd.f32 0.0, %v907
        %v909 = vpop.f32.mrf.mxu0
        %v910 = vpop.f32.mrf.mxu0
        %v911 = vadd.f32 0.0, %v910
        %v912 = vpop.f32.mrf.mxu0
        %913 = vmatprep.mubr.bf16.mxu0 %v812
        %914 = vmatmul.mubr.bf16.gmra.mxu0 %v811
        %v915 = vpop.f32.mrf.mxu0
        %v916 = vadd.f32 0.0, %v915
        %v917 = vpop.f32.mrf.mxu0
        %v918 = vpop.f32.mrf.mxu0
        %v919 = vadd.f32 0.0, %v918
        %v920 = vpop.f32.mrf.mxu0
        %921 = vmatprep.mubr.bf16.mxu0 %v814
        %922 = vmatmul.mubr.bf16.gmra.mxu0 %v813
        %v923 = vpop.f32.mrf.mxu0
        %v924 = vadd.f32 0.0, %v923
        %v925 = vpop.f32.mrf.mxu0
        %v926 = vpop.f32.mrf.mxu0
        %v927 = vadd.f32 0.0, %v926
        %v928 = vpop.f32.mrf.mxu0
        %929 = vmatprep.mubr.bf16.mxu0 %v816
        %930 = vmatmul.mubr.bf16.gmra.mxu0 %v815
        %v931 = vpop.f32.mrf.mxu0
        %v932 = vadd.f32 0.0, %v931
        %v933 = vpop.f32.mrf.mxu0
        %v934 = vpop.f32.mrf.mxu0
        %v935 = vadd.f32 0.0, %v934
        %v936 = vpop.f32.mrf.mxu0
        %937 = vmatprep.mubr.bf16.mxu0 %v818
        %938 = vmatmul.mubr.bf16.gmra.mxu0 %v817
        %v939 = vpop.f32.mrf.mxu0
        %v940 = vadd.f32 0.0, %v939
        %v941 = vpop.f32.mrf.mxu0
        %v942 = vpop.f32.mrf.mxu0
        %v943 = vadd.f32 0.0, %v942
        %v944 = vpop.f32.mrf.mxu0
        %945 = vmatprep.mubr.bf16.mxu0 %v820
        %946 = vmatmul.mubr.bf16.gmra.mxu0 %v819
        %v947 = vpop.f32.mrf.mxu0
        %v948 = vadd.f32 0.0, %v947
        %v949 = vpop.f32.mrf.mxu0
        %v950 = vpop.f32.mrf.mxu0
        %v951 = vadd.f32 0.0, %v950
        %v952 = vpop.f32.mrf.mxu0
        %953 = vmatprep.mubr.bf16.mxu0 %v822
        %954 = vmatmul.mubr.bf16.gmra.mxu0 %v821
        %v955 = vpop.f32.mrf.mxu0
        %v956 = vadd.f32 0.0, %v955
        %v957 = vpop.f32.mrf.mxu0
        %v958 = vpop.f32.mrf.mxu0
        %v959 = vadd.f32 0.0, %v958
        %v960 = vpop.f32.mrf.mxu0
        %961 = vmatprep.mubr.bf16.mxu0 %v824
        %962 = vmatmul.mubr.bf16.gmra.mxu0 %v823
        %v963 = vpop.f32.mrf.mxu0
        %v964 = vadd.f32 0.0, %v963
        %v965 = vpop.f32.mrf.mxu0
        %v966 = vpop.f32.mrf.mxu0
        %v967 = vadd.f32 0.0, %v966
        %v968 = vpop.f32.mrf.mxu0
        %969 = vmatprep.mubr.bf16.mxu0 %v826
        %970 = vmatmul.mubr.bf16.gmra.mxu0 %v825
        %v971 = vpop.f32.mrf.mxu0
        %v972 = vadd.f32 0.0, %v971
        %v973 = vpop.f32.mrf.mxu0
        %v974 = vpop.f32.mrf.mxu0
        %v975 = vadd.f32 0.0, %v974
        %v976 = vpop.f32.mrf.mxu0
        %977 = vmatprep.mubr.bf16.mxu0 %v828
        %978 = vmatmul.mubr.bf16.gmra.mxu0 %v827
        %v979 = vpop.f32.mrf.mxu0
        %v980 = vadd.f32 0.0, %v979
        %v981 = vpop.f32.mrf.mxu0
        %v982 = vpop.f32.mrf.mxu0
        %v983 = vadd.f32 0.0, %v982
        %v984 = vpop.f32.mrf.mxu0
        %985 = vmatprep.mubr.bf16.mxu0 %v830
        %986 = vmatmul.mubr.bf16.gmra.mxu0 %v829
        %v987 = vpop.f32.mrf.mxu0
        %v988 = vadd.f32 0.0, %v987
        %v989 = vpop.f32.mrf.mxu0
        %v990 = vpop.f32.mrf.mxu0
        %v991 = vadd.f32 0.0, %v990
        %v992 = vpop.f32.mrf.mxu0
        %993 = vmatprep.mubr.bf16.mxu0 %v832
        %994 = vmatmul.mubr.bf16.gmra.mxu0 %v831
        %v995 = vpop.f32.mrf.mxu0
        %v996 = vadd.f32 0.0, %v995
        %v997 = vpop.f32.mrf.mxu0
        %v998 = vpop.f32.mrf.mxu0
        %v999 = vadd.f32 0.0, %v998
        %v1000 = vpop.f32.mrf.mxu0
        %1001 = vmatprep.mubr.bf16.mxu0 %v834
        %1002 = vmatmul.mubr.bf16.gmra.mxu0 %v833
        %v1003 = vpop.f32.mrf.mxu0
        %v1004 = vadd.f32 0.0, %v1003
        %v1005 = vpop.f32.mrf.mxu0
        %v1006 = vpop.f32.mrf.mxu0
        %v1007 = vadd.f32 0.0, %v1006
        %v1008 = vpop.f32.mrf.mxu0
        %1009 = vmatprep.mubr.bf16.mxu0 %v836
        %1010 = vmatmul.mubr.bf16.gmra.mxu0 %v835
        %v1011 = vpop.f32.mrf.mxu0
        %v1012 = vadd.f32 0.0, %v1011
        %v1013 = vpop.f32.mrf.mxu0
        %v1014 = vpop.f32.mrf.mxu0
        %v1015 = vadd.f32 0.0, %v1014
        %v1016 = vpop.f32.mrf.mxu0
        %1017 = vmatprep.mubr.bf16.mxu0 %v838
        %1018 = vmatmul.mubr.bf16.gmra.mxu0 %v837
        %v1019 = vpop.f32.mrf.mxu0
        %v1020 = vadd.f32 0.0, %v1019
        %v1021 = vpop.f32.mrf.mxu0
        %v1022 = vpop.f32.mrf.mxu0
        %v1023 = vadd.f32 0.0, %v1022
        %v1024 = vpop.f32.mrf.mxu0
        %1025 = vmatprep.mubr.bf16.mxu0 %v840
        %1026 = vmatmul.mubr.bf16.gmra.mxu0 %v839
        %v1027 = vpop.f32.mrf.mxu0
        %v1028 = vadd.f32 0.0, %v1027
        %v1029 = vpop.f32.mrf.mxu0
        %v1030 = vpop.f32.mrf.mxu0
        %v1031 = vadd.f32 0.0, %v1030
        %v1032 = vpop.f32.mrf.mxu0
        %1033 = vdwg.mxu0
        %v1034 = vadd.f32 %v649, %v908
        %v1035 = vadd.f32 %v650, %v911
        %v1036 = vadd.f32 %v651, %v916
        %v1037 = vadd.f32 %v652, %v919
        %v1038 = vadd.f32 %v653, %v924
        %v1039 = vadd.f32 %v654, %v927
        %v1040 = vadd.f32 %v655, %v932
        %v1041 = vadd.f32 %v656, %v935
        %v1042 = vadd.f32 %v657, %v940
        %v1043 = vadd.f32 %v658, %v943
        %v1044 = vadd.f32 %v659, %v948
        %v1045 = vadd.f32 %v660, %v951
        %v1046 = vadd.f32 %v661, %v956
        %v1047 = vadd.f32 %v662, %v959
        %v1048 = vadd.f32 %v663, %v964
        %v1049 = vadd.f32 %v664, %v967
        %v1050 = vadd.f32 %v665, %v972
        %v1051 = vadd.f32 %v666, %v975
        %v1052 = vadd.f32 %v667, %v980
        %v1053 = vadd.f32 %v668, %v983
        %v1054 = vadd.f32 %v669, %v988
        %v1055 = vadd.f32 %v670, %v991
        %v1056 = vadd.f32 %v671, %v996
        %v1057 = vadd.f32 %v672, %v999
        %v1058 = vadd.f32 %v673, %v1004
        %v1059 = vadd.f32 %v674, %v1007
        %v1060 = vadd.f32 %v675, %v1012
        %v1061 = vadd.f32 %v676, %v1015
        %v1062 = vadd.f32 %v677, %v1020
        %v1063 = vadd.f32 %v678, %v1023
        %v1064 = vadd.f32 %v679, %v1028
        %v1065 = vadd.f32 %v680, %v1031
        %1066 = vst [vmem:[#allocation2] sm:$0xff] %v1034
        %1067 = vst [vmem:[#allocation2 + $0x8] sm:$0xff] %v1035
        %1068 = vst [vmem:[#allocation2 + $0x10] sm:$0xff] %v1036
        %1069 = vst [vmem:[#allocation2 + $0x18] sm:$0xff] %v1037
        %1070 = vst [vmem:[#allocation2 + $0x20] sm:$0xff] %v1038
        %1071 = vst [vmem:[#allocation2 + $0x28] sm:$0xff] %v1039
        %1072 = vst [vmem:[#allocation2 + $0x30] sm:$0xff] %v1040
        %1073 = vst [vmem:[#allocation2 + $0x38] sm:$0xff] %v1041
        %1074 = vst [vmem:[#allocation2 + $0x40] sm:$0xff] %v1042
        %1075 = vst [vmem:[#allocation2 + $0x48] sm:$0xff] %v1043
        %1076 = vst [vmem:[#allocation2 + $0x50] sm:$0xff] %v1044
        %1077 = vst [vmem:[#allocation2 + $0x58] sm:$0xff] %v1045
        %1078 = vst [vmem:[#allocation2 + $0x60] sm:$0xff] %v1046
        %1079 = vst [vmem:[#allocation2 + $0x68] sm:$0xff] %v1047
        %1080 = vst [vmem:[#allocation2 + $0x70] sm:$0xff] %v1048
        %1081 = vst [vmem:[#allocation2 + $0x78] sm:$0xff] %v1049
        %1082 = vst [vmem:[#allocation2 + $0x80] sm:$0xff] %v1050
        %1083 = vst [vmem:[#allocation2 + $0x88] sm:$0xff] %v1051
        %1084 = vst [vmem:[#allocation2 + $0x90] sm:$0xff] %v1052
        %1085 = vst [vmem:[#allocation2 + $0x98] sm:$0xff] %v1053
        %1086 = vst [vmem:[#allocation2 + $0xa0] sm:$0xff] %v1054
        %1087 = vst [vmem:[#allocation2 + $0xa8] sm:$0xff] %v1055
        %1088 = vst [vmem:[#allocation2 + $0xb0] sm:$0xff] %v1056
        %1089 = vst [vmem:[#allocation2 + $0xb8] sm:$0xff] %v1057
        %1090 = vst [vmem:[#allocation2 + $0xc0] sm:$0xff] %v1058
        %1091 = vst [vmem:[#allocation2 + $0xc8] sm:$0xff] %v1059
        %1092 = vst [vmem:[#allocation2 + $0xd0] sm:$0xff] %v1060
        %1093 = vst [vmem:[#allocation2 + $0xd8] sm:$0xff] %v1061
        %1094 = vst [vmem:[#allocation2 + $0xe0] sm:$0xff] %v1062
        %1095 = vst [vmem:[#allocation2 + $0xe8] sm:$0xff] %v1063
        %1096 = vst [vmem:[#allocation2 + $0xf0] sm:$0xff] %v1064
        %1097 = vst [vmem:[#allocation2 + $0xf8] sm:$0xff] %v1065
        %p1098 = scmp.eq.s32.totalorder %s26, 1
        // Predicated region
        $region45: #{tpu_custom_call.1} parent=35 // pred_check
          %p1099 = pneg %p1098
        $region46: #{tpu_custom_call.1} parent=35 // pred_check_branch
          %1101 = sbr.rel (%p1099) target = $region48
        $region47: #{tpu_custom_call.1} parent=35 // pred_region
          %v1102 = vld [vmem:[#allocation2] sm:$0xff]
          %v1103 = vld [vmem:[#allocation2 + $0x8] sm:$0xff]
          %v1104 = vld [vmem:[#allocation2 + $0x10] sm:$0xff]
          %v1105 = vld [vmem:[#allocation2 + $0x18] sm:$0xff]
          %v1106 = vld [vmem:[#allocation2 + $0x20] sm:$0xff]
          %v1107 = vld [vmem:[#allocation2 + $0x28] sm:$0xff]
          %v1108 = vld [vmem:[#allocation2 + $0x30] sm:$0xff]
          %v1109 = vld [vmem:[#allocation2 + $0x38] sm:$0xff]
          %v1110 = vld [vmem:[#allocation2 + $0x40] sm:$0xff]
          %v1111 = vld [vmem:[#allocation2 + $0x48] sm:$0xff]
          %v1112 = vld [vmem:[#allocation2 + $0x50] sm:$0xff]
          %v1113 = vld [vmem:[#allocation2 + $0x58] sm:$0xff]
          %v1114 = vld [vmem:[#allocation2 + $0x60] sm:$0xff]
          %v1115 = vld [vmem:[#allocation2 + $0x68] sm:$0xff]
          %v1116 = vld [vmem:[#allocation2 + $0x70] sm:$0xff]
          %v1117 = vld [vmem:[#allocation2 + $0x78] sm:$0xff]
          %v1118 = vld [vmem:[#allocation2 + $0x80] sm:$0xff]
          %v1119 = vld [vmem:[#allocation2 + $0x88] sm:$0xff]
          %v1120 = vld [vmem:[#allocation2 + $0x90] sm:$0xff]
          %v1121 = vld [vmem:[#allocation2 + $0x98] sm:$0xff]
          %v1122 = vld [vmem:[#allocation2 + $0xa0] sm:$0xff]
          %v1123 = vld [vmem:[#allocation2 + $0xa8] sm:$0xff]
          %v1124 = vld [vmem:[#allocation2 + $0xb0] sm:$0xff]
          %v1125 = vld [vmem:[#allocation2 + $0xb8] sm:$0xff]
          %v1126 = vld [vmem:[#allocation2 + $0xc0] sm:$0xff]
          %v1127 = vld [vmem:[#allocation2 + $0xc8] sm:$0xff]
          %v1128 = vld [vmem:[#allocation2 + $0xd0] sm:$0xff]
          %v1129 = vld [vmem:[#allocation2 + $0xd8] sm:$0xff]
          %v1130 = vld [vmem:[#allocation2 + $0xe0] sm:$0xff]
          %v1131 = vld [vmem:[#allocation2 + $0xe8] sm:$0xff]
          %v1132 = vld [vmem:[#allocation2 + $0xf0] sm:$0xff]
          %v1133 = vld [vmem:[#allocation2 + $0xf8] sm:$0xff]
          %v1134 = vmax.f32 %v1102, 0.0
          %v1135 = vmax.f32 %v1103, 0.0
          %v1136 = vmax.f32 %v1104, 0.0
          %v1137 = vmax.f32 %v1105, 0.0
          %v1138 = vmax.f32 %v1106, 0.0
          %v1139 = vmax.f32 %v1107, 0.0
          %v1140 = vmax.f32 %v1108, 0.0
          %v1141 = vmax.f32 %v1109, 0.0
          %v1142 = vmax.f32 %v1110, 0.0
          %v1143 = vmax.f32 %v1111, 0.0
          %v1144 = vmax.f32 %v1112, 0.0
          %v1145 = vmax.f32 %v1113, 0.0
          %v1146 = vmax.f32 %v1114, 0.0
          %v1147 = vmax.f32 %v1115, 0.0
          %v1148 = vmax.f32 %v1116, 0.0
          %v1149 = vmax.f32 %v1117, 0.0
          %v1150 = vmax.f32 %v1118, 0.0
          %v1151 = vmax.f32 %v1119, 0.0
          %v1152 = vmax.f32 %v1120, 0.0
          %v1153 = vmax.f32 %v1121, 0.0
          %v1154 = vmax.f32 %v1122, 0.0
          %v1155 = vmax.f32 %v1123, 0.0
          %v1156 = vmax.f32 %v1124, 0.0
          %v1157 = vmax.f32 %v1125, 0.0
          %v1158 = vmax.f32 %v1126, 0.0
          %v1159 = vmax.f32 %v1127, 0.0
          %v1160 = vmax.f32 %v1128, 0.0
          %v1161 = vmax.f32 %v1129, 0.0
          %v1162 = vmax.f32 %v1130, 0.0
          %v1163 = vmax.f32 %v1131, 0.0
          %v1164 = vmax.f32 %v1132, 0.0
          %v1165 = vmax.f32 %v1133, 0.0
          %1166 = vst [vmem:[#allocation2] sm:$0xff] %v1134
          %1167 = vst [vmem:[#allocation2 + $0x8] sm:$0xff] %v1135
          %1168 = vst [vmem:[#allocation2 + $0x10] sm:$0xff] %v1136
          %1169 = vst [vmem:[#allocation2 + $0x18] sm:$0xff] %v1137
          %1170 = vst [vmem:[#allocation2 + $0x20] sm:$0xff] %v1138
          %1171 = vst [vmem:[#allocation2 + $0x28] sm:$0xff] %v1139
          %1172 = vst [vmem:[#allocation2 + $0x30] sm:$0xff] %v1140
          %1173 = vst [vmem:[#allocation2 + $0x38] sm:$0xff] %v1141
          %1174 = vst [vmem:[#allocation2 + $0x40] sm:$0xff] %v1142
          %1175 = vst [vmem:[#allocation2 + $0x48] sm:$0xff] %v1143
          %1176 = vst [vmem:[#allocation2 + $0x50] sm:$0xff] %v1144
          %1177 = vst [vmem:[#allocation2 + $0x58] sm:$0xff] %v1145
          %1178 = vst [vmem:[#allocation2 + $0x60] sm:$0xff] %v1146
          %1179 = vst [vmem:[#allocation2 + $0x68] sm:$0xff] %v1147
          %1180 = vst [vmem:[#allocation2 + $0x70] sm:$0xff] %v1148
          %1181 = vst [vmem:[#allocation2 + $0x78] sm:$0xff] %v1149
          %1182 = vst [vmem:[#allocation2 + $0x80] sm:$0xff] %v1150
          %1183 = vst [vmem:[#allocation2 + $0x88] sm:$0xff] %v1151
          %1184 = vst [vmem:[#allocation2 + $0x90] sm:$0xff] %v1152
          %1185 = vst [vmem:[#allocation2 + $0x98] sm:$0xff] %v1153
          %1186 = vst [vmem:[#allocation2 + $0xa0] sm:$0xff] %v1154
          %1187 = vst [vmem:[#allocation2 + $0xa8] sm:$0xff] %v1155
          %1188 = vst [vmem:[#allocation2 + $0xb0] sm:$0xff] %v1156
          %1189 = vst [vmem:[#allocation2 + $0xb8] sm:$0xff] %v1157
          %1190 = vst [vmem:[#allocation2 + $0xc0] sm:$0xff] %v1158
          %1191 = vst [vmem:[#allocation2 + $0xc8] sm:$0xff] %v1159
          %1192 = vst [vmem:[#allocation2 + $0xd0] sm:$0xff] %v1160
          %1193 = vst [vmem:[#allocation2 + $0xd8] sm:$0xff] %v1161
          %1194 = vst [vmem:[#allocation2 + $0xe0] sm:$0xff] %v1162
          %1195 = vst [vmem:[#allocation2 + $0xe8] sm:$0xff] %v1163
          %1196 = vst [vmem:[#allocation2 + $0xf0] sm:$0xff] %v1164
          %1197 = vst [vmem:[#allocation2 + $0xf8] sm:$0xff] %v1165
          %v1198 = vld [vmem:[#allocation2] sm:$0xff]
          %v1199 = vld [vmem:[#allocation2 + $0x8] sm:$0xff]
          %v1200 = vld [vmem:[#allocation2 + $0x10] sm:$0xff]
          %v1201 = vld [vmem:[#allocation2 + $0x18] sm:$0xff]
          %v1202 = vld [vmem:[#allocation2 + $0x20] sm:$0xff]
          %v1203 = vld [vmem:[#allocation2 + $0x28] sm:$0xff]
          %v1204 = vld [vmem:[#allocation2 + $0x30] sm:$0xff]
          %v1205 = vld [vmem:[#allocation2 + $0x38] sm:$0xff]
          %v1206 = vld [vmem:[#allocation2 + $0x40] sm:$0xff]
          %v1207 = vld [vmem:[#allocation2 + $0x48] sm:$0xff]
          %v1208 = vld [vmem:[#allocation2 + $0x50] sm:$0xff]
          %v1209 = vld [vmem:[#allocation2 + $0x58] sm:$0xff]
          %v1210 = vld [vmem:[#allocation2 + $0x60] sm:$0xff]
          %v1211 = vld [vmem:[#allocation2 + $0x68] sm:$0xff]
          %v1212 = vld [vmem:[#allocation2 + $0x70] sm:$0xff]
          %v1213 = vld [vmem:[#allocation2 + $0x78] sm:$0xff]
          %v1214 = vld [vmem:[#allocation2 + $0x80] sm:$0xff]
          %v1215 = vld [vmem:[#allocation2 + $0x88] sm:$0xff]
          %v1216 = vld [vmem:[#allocation2 + $0x90] sm:$0xff]
          %v1217 = vld [vmem:[#allocation2 + $0x98] sm:$0xff]
          %v1218 = vld [vmem:[#allocation2 + $0xa0] sm:$0xff]
          %v1219 = vld [vmem:[#allocation2 + $0xa8] sm:$0xff]
          %v1220 = vld [vmem:[#allocation2 + $0xb0] sm:$0xff]
          %v1221 = vld [vmem:[#allocation2 + $0xb8] sm:$0xff]
          %v1222 = vld [vmem:[#allocation2 + $0xc0] sm:$0xff]
          %v1223 = vld [vmem:[#allocation2 + $0xc8] sm:$0xff]
          %v1224 = vld [vmem:[#allocation2 + $0xd0] sm:$0xff]
          %v1225 = vld [vmem:[#allocation2 + $0xd8] sm:$0xff]
          %v1226 = vld [vmem:[#allocation2 + $0xe0] sm:$0xff]
          %v1227 = vld [vmem:[#allocation2 + $0xe8] sm:$0xff]
          %v1228 = vld [vmem:[#allocation2 + $0xf0] sm:$0xff]
          %v1229 = vld [vmem:[#allocation2 + $0xf8] sm:$0xff]
          %v1230 = vpack.c.bf16 %v1199, %v1198
          %v1231 = vpack.c.bf16 %v1201, %v1200
          %v1232 = vpack.c.bf16 %v1203, %v1202
          %v1233 = vpack.c.bf16 %v1205, %v1204
          %v1234 = vpack.c.bf16 %v1207, %v1206
          %v1235 = vpack.c.bf16 %v1209, %v1208
          %v1236 = vpack.c.bf16 %v1211, %v1210
          %v1237 = vpack.c.bf16 %v1213, %v1212
          %v1238 = vpack.c.bf16 %v1215, %v1214
          %v1239 = vpack.c.bf16 %v1217, %v1216
          %v1240 = vpack.c.bf16 %v1219, %v1218
          %v1241 = vpack.c.bf16 %v1221, %v1220
          %v1242 = vpack.c.bf16 %v1223, %v1222
          %v1243 = vpack.c.bf16 %v1225, %v1224
          %v1244 = vpack.c.bf16 %v1227, %v1226
          %v1245 = vpack.c.bf16 %v1229, %v1228
          %v1246 = vld [vmem:[%s3] sm:$0xff]
          %v1247 = vld [vmem:[%s3 + $0x8] sm:$0xff]
          %v1248 = vld [vmem:[%s3 + $0x10] sm:$0xff]
          %v1249 = vld [vmem:[%s3 + $0x18] sm:$0xff]
          %v1250 = vld [vmem:[%s3 + $0x20] sm:$0xff]
          %v1251 = vld [vmem:[%s3 + $0x28] sm:$0xff]
          %v1252 = vld [vmem:[%s3 + $0x30] sm:$0xff]
          %v1253 = vld [vmem:[%s3 + $0x38] sm:$0xff]
          %v1254 = vld [vmem:[%s3 + $0x40] sm:$0xff]
          %v1255 = vld [vmem:[%s3 + $0x48] sm:$0xff]
          %v1256 = vld [vmem:[%s3 + $0x50] sm:$0xff]
          %v1257 = vld [vmem:[%s3 + $0x58] sm:$0xff]
          %v1258 = vld [vmem:[%s3 + $0x60] sm:$0xff]
          %v1259 = vld [vmem:[%s3 + $0x68] sm:$0xff]
          %v1260 = vld [vmem:[%s3 + $0x70] sm:$0xff]
          %v1261 = vld [vmem:[%s3 + $0x78] sm:$0xff]
          %v1278 = vunpack.c.l.b16 %v1246
          %v1279 = vunpack.c.h.b16 %v1246
          %v1280 = vunpack.c.l.b16 %v1247
          %v1281 = vunpack.c.h.b16 %v1247
          %v1282 = vunpack.c.l.b16 %v1248
          %v1283 = vunpack.c.h.b16 %v1248
          %v1284 = vunpack.c.l.b16 %v1249
          %v1285 = vunpack.c.h.b16 %v1249
          %v1286 = vunpack.c.l.b16 %v1250
          %v1287 = vunpack.c.h.b16 %v1250
          %v1288 = vunpack.c.l.b16 %v1251
          %v1289 = vunpack.c.h.b16 %v1251
          %v1290 = vunpack.c.l.b16 %v1252
          %v1291 = vunpack.c.h.b16 %v1252
          %v1292 = vunpack.c.l.b16 %v1253
          %v1293 = vunpack.c.h.b16 %v1253
          %v1294 = vunpack.c.l.b16 %v1254
          %v1295 = vunpack.c.h.b16 %v1254
          %v1296 = vunpack.c.l.b16 %v1255
          %v1297 = vunpack.c.h.b16 %v1255
          %v1298 = vunpack.c.l.b16 %v1256
          %v1299 = vunpack.c.h.b16 %v1256
          %v1300 = vunpack.c.l.b16 %v1257
          %v1301 = vunpack.c.h.b16 %v1257
          %v1302 = vunpack.c.l.b16 %v1258
          %v1303 = vunpack.c.h.b16 %v1258
          %v1304 = vunpack.c.l.b16 %v1259
          %v1305 = vunpack.c.h.b16 %v1259
          %v1306 = vunpack.c.l.b16 %v1260
          %v1307 = vunpack.c.h.b16 %v1260
          %v1308 = vunpack.c.l.b16 %v1261
          %v1309 = vunpack.c.h.b16 %v1261
          %v1310 = vpack.c.b16 %v1280, %v1278
          %v1311 = vpack.c.b16 %v1281, %v1279
          %v1312 = vpack.c.b16 %v1284, %v1282
          %v1313 = vpack.c.b16 %v1285, %v1283
          %v1314 = vpack.c.b16 %v1288, %v1286
          %v1315 = vpack.c.b16 %v1289, %v1287
          %v1316 = vpack.c.b16 %v1292, %v1290
          %v1317 = vpack.c.b16 %v1293, %v1291
          %v1318 = vpack.c.b16 %v1296, %v1294
          %v1319 = vpack.c.b16 %v1297, %v1295
          %v1320 = vpack.c.b16 %v1300, %v1298
          %v1321 = vpack.c.b16 %v1301, %v1299
          %v1322 = vpack.c.b16 %v1304, %v1302
          %v1323 = vpack.c.b16 %v1305, %v1303
          %v1324 = vpack.c.b16 %v1308, %v1306
          %v1325 = vpack.c.b16 %v1309, %v1307
          %1342 = vmatprep.subr.bf16.mxu0 %v1325
          %1343 = vmatpush1.bf16.msra.mxu0 %v1324
          %1344 = vmatprep.subr.bf16.mxu0 %v1323
          %1345 = vmatpush1.bf16.msra.mxu0 %v1322
          %1346 = vmatprep.subr.bf16.mxu0 %v1321
          %1347 = vmatpush1.bf16.msra.mxu0 %v1320
          %1348 = vmatprep.subr.bf16.mxu0 %v1319
          %1349 = vmatpush1.bf16.msra.mxu0 %v1318
          %1350 = vmatprep.subr.bf16.mxu0 %v1317
          %1351 = vmatpush1.bf16.msra.mxu0 %v1316
          %1352 = vmatprep.subr.bf16.mxu0 %v1315
          %1353 = vmatpush1.bf16.msra.mxu0 %v1314
          %1354 = vmatprep.subr.bf16.mxu0 %v1313
          %1355 = vmatpush1.bf16.msra.mxu0 %v1312
          %1356 = vmatprep.subr.bf16.mxu0 %v1311
          %1357 = vmatpush1.bf16.msra.mxu0 %v1310
          %1358 = vmatprep.subr.bf16.mxu0 0
          %1359 = vmatpush2.bf16.msra.mxu0 0
          %1360 = vmatprep.subr.bf16.mxu0 0
          %1361 = vmatpush2.bf16.msra.mxu0 0
          %1362 = vmatprep.subr.bf16.mxu0 0
          %1363 = vmatpush2.bf16.msra.mxu0 0
          %1364 = vmatprep.subr.bf16.mxu0 0
          %1365 = vmatpush2.bf16.msra.mxu0 0
          %1366 = vmatprep.subr.bf16.mxu0 0
          %1367 = vmatpush2.bf16.msra.mxu0 0
          %1368 = vmatprep.subr.bf16.mxu0 0
          %1369 = vmatpush2.bf16.msra.mxu0 0
          %1370 = vmatprep.subr.bf16.mxu0 0
          %1371 = vmatpush2.bf16.msra.mxu0 0
          %1372 = vmatprep.subr.bf16.mxu0 0
          %1373 = vmatpush2.bf16.msra.mxu0 0
          %1374 = vmatprep.mubr.bf16.mxu0 0
          %1375 = vmatmul.mubr.bf16.gmra.mxu0 %v1230
          %v1376 = vpop.f32.mrf.mxu0
          %v1377 = vadd.f32 0.0, %v1376
          %v1378 = vpop.f32.mrf.mxu0
          %v1379 = vadd.f32 0.0, %v1378
          %v1380 = vpop.f32.mrf.mxu0
          %v1381 = vadd.f32 0.0, %v1380
          %v1382 = vpop.f32.mrf.mxu0
          %v1383 = vadd.f32 0.0, %v1382
          %1384 = vmatprep.mubr.bf16.mxu0 0
          %1385 = vmatmul.mubr.bf16.gmra.mxu0 %v1231
          %v1386 = vpop.f32.mrf.mxu0
          %v1387 = vadd.f32 0.0, %v1386
          %v1388 = vpop.f32.mrf.mxu0
          %v1389 = vadd.f32 0.0, %v1388
          %v1390 = vpop.f32.mrf.mxu0
          %v1391 = vadd.f32 0.0, %v1390
          %v1392 = vpop.f32.mrf.mxu0
          %v1393 = vadd.f32 0.0, %v1392
          %1394 = vmatprep.mubr.bf16.mxu0 0
          %1395 = vmatmul.mubr.bf16.gmra.mxu0 %v1232
          %v1396 = vpop.f32.mrf.mxu0
          %v1397 = vadd.f32 0.0, %v1396
          %v1398 = vpop.f32.mrf.mxu0
          %v1399 = vadd.f32 0.0, %v1398
          %v1400 = vpop.f32.mrf.mxu0
          %v1401 = vadd.f32 0.0, %v1400
          %v1402 = vpop.f32.mrf.mxu0
          %v1403 = vadd.f32 0.0, %v1402
          %1404 = vmatprep.mubr.bf16.mxu0 0
          %1405 = vmatmul.mubr.bf16.gmra.mxu0 %v1233
          %v1406 = vpop.f32.mrf.mxu0
          %v1407 = vadd.f32 0.0, %v1406
          %v1408 = vpop.f32.mrf.mxu0
          %v1409 = vadd.f32 0.0, %v1408
          %v1410 = vpop.f32.mrf.mxu0
          %v1411 = vadd.f32 0.0, %v1410
          %v1412 = vpop.f32.mrf.mxu0
          %v1413 = vadd.f32 0.0, %v1412
          %1414 = vmatprep.mubr.bf16.mxu0 0
          %1415 = vmatmul.mubr.bf16.gmra.mxu0 %v1234
          %v1416 = vpop.f32.mrf.mxu0
          %v1417 = vadd.f32 0.0, %v1416
          %v1418 = vpop.f32.mrf.mxu0
          %v1419 = vadd.f32 0.0, %v1418
          %v1420 = vpop.f32.mrf.mxu0
          %v1421 = vadd.f32 0.0, %v1420
          %v1422 = vpop.f32.mrf.mxu0
          %v1423 = vadd.f32 0.0, %v1422
          %1424 = vmatprep.mubr.bf16.mxu0 0
          %1425 = vmatmul.mubr.bf16.gmra.mxu0 %v1235
          %v1426 = vpop.f32.mrf.mxu0
          %v1427 = vadd.f32 0.0, %v1426
          %v1428 = vpop.f32.mrf.mxu0
          %v1429 = vadd.f32 0.0, %v1428
          %v1430 = vpop.f32.mrf.mxu0
          %v1431 = vadd.f32 0.0, %v1430
          %v1432 = vpop.f32.mrf.mxu0
          %v1433 = vadd.f32 0.0, %v1432
          %1434 = vmatprep.mubr.bf16.mxu0 0
          %1435 = vmatmul.mubr.bf16.gmra.mxu0 %v1236
          %v1436 = vpop.f32.mrf.mxu0
          %v1437 = vadd.f32 0.0, %v1436
          %v1438 = vpop.f32.mrf.mxu0
          %v1439 = vadd.f32 0.0, %v1438
          %v1440 = vpop.f32.mrf.mxu0
          %v1441 = vadd.f32 0.0, %v1440
          %v1442 = vpop.f32.mrf.mxu0
          %v1443 = vadd.f32 0.0, %v1442
          %1444 = vmatprep.mubr.bf16.mxu0 0
          %1445 = vmatmul.mubr.bf16.gmra.mxu0 %v1237
          %v1446 = vpop.f32.mrf.mxu0
          %v1447 = vadd.f32 0.0, %v1446
          %v1448 = vpop.f32.mrf.mxu0
          %v1449 = vadd.f32 0.0, %v1448
          %v1450 = vpop.f32.mrf.mxu0
          %v1451 = vadd.f32 0.0, %v1450
          %v1452 = vpop.f32.mrf.mxu0
          %v1453 = vadd.f32 0.0, %v1452
          %1454 = vmatprep.mubr.bf16.mxu0 0
          %1455 = vmatmul.mubr.bf16.gmra.mxu0 %v1238
          %v1456 = vpop.f32.mrf.mxu0
          %v1457 = vadd.f32 0.0, %v1456
          %v1458 = vpop.f32.mrf.mxu0
          %v1459 = vadd.f32 0.0, %v1458
          %v1460 = vpop.f32.mrf.mxu0
          %v1461 = vadd.f32 0.0, %v1460
          %v1462 = vpop.f32.mrf.mxu0
          %v1463 = vadd.f32 0.0, %v1462
          %1464 = vmatprep.mubr.bf16.mxu0 0
          %1465 = vmatmul.mubr.bf16.gmra.mxu0 %v1239
          %v1466 = vpop.f32.mrf.mxu0
          %v1467 = vadd.f32 0.0, %v1466
          %v1468 = vpop.f32.mrf.mxu0
          %v1469 = vadd.f32 0.0, %v1468
          %v1470 = vpop.f32.mrf.mxu0
          %v1471 = vadd.f32 0.0, %v1470
          %v1472 = vpop.f32.mrf.mxu0
          %v1473 = vadd.f32 0.0, %v1472
          %1474 = vmatprep.mubr.bf16.mxu0 0
          %1475 = vmatmul.mubr.bf16.gmra.mxu0 %v1240
          %v1476 = vpop.f32.mrf.mxu0
          %v1477 = vadd.f32 0.0, %v1476
          %v1478 = vpop.f32.mrf.mxu0
          %v1479 = vadd.f32 0.0, %v1478
          %v1480 = vpop.f32.mrf.mxu0
          %v1481 = vadd.f32 0.0, %v1480
          %v1482 = vpop.f32.mrf.mxu0
          %v1483 = vadd.f32 0.0, %v1482
          %1484 = vmatprep.mubr.bf16.mxu0 0
          %1485 = vmatmul.mubr.bf16.gmra.mxu0 %v1241
          %v1486 = vpop.f32.mrf.mxu0
          %v1487 = vadd.f32 0.0, %v1486
          %v1488 = vpop.f32.mrf.mxu0
          %v1489 = vadd.f32 0.0, %v1488
          %v1490 = vpop.f32.mrf.mxu0
          %v1491 = vadd.f32 0.0, %v1490
          %v1492 = vpop.f32.mrf.mxu0
          %v1493 = vadd.f32 0.0, %v1492
          %1494 = vmatprep.mubr.bf16.mxu0 0
          %1495 = vmatmul.mubr.bf16.gmra.mxu0 %v1242
          %v1496 = vpop.f32.mrf.mxu0
          %v1497 = vadd.f32 0.0, %v1496
          %v1498 = vpop.f32.mrf.mxu0
          %v1499 = vadd.f32 0.0, %v1498
          %v1500 = vpop.f32.mrf.mxu0
          %v1501 = vadd.f32 0.0, %v1500
          %v1502 = vpop.f32.mrf.mxu0
          %v1503 = vadd.f32 0.0, %v1502
          %1504 = vmatprep.mubr.bf16.mxu0 0
          %1505 = vmatmul.mubr.bf16.gmra.mxu0 %v1243
          %v1506 = vpop.f32.mrf.mxu0
          %v1507 = vadd.f32 0.0, %v1506
          %v1508 = vpop.f32.mrf.mxu0
          %v1509 = vadd.f32 0.0, %v1508
          %v1510 = vpop.f32.mrf.mxu0
          %v1511 = vadd.f32 0.0, %v1510
          %v1512 = vpop.f32.mrf.mxu0
          %v1513 = vadd.f32 0.0, %v1512
          %1514 = vmatprep.mubr.bf16.mxu0 0
          %1515 = vmatmul.mubr.bf16.gmra.mxu0 %v1244
          %v1516 = vpop.f32.mrf.mxu0
          %v1517 = vadd.f32 0.0, %v1516
          %v1518 = vpop.f32.mrf.mxu0
          %v1519 = vadd.f32 0.0, %v1518
          %v1520 = vpop.f32.mrf.mxu0
          %v1521 = vadd.f32 0.0, %v1520
          %v1522 = vpop.f32.mrf.mxu0
          %v1523 = vadd.f32 0.0, %v1522
          %1524 = vmatprep.mubr.bf16.mxu0 0
          %1525 = vmatmul.mubr.bf16.gmra.mxu0 %v1245
          %v1526 = vpop.f32.mrf.mxu0
          %v1527 = vadd.f32 0.0, %v1526
          %v1528 = vpop.f32.mrf.mxu0
          %v1529 = vadd.f32 0.0, %v1528
          %v1530 = vpop.f32.mrf.mxu0
          %v1531 = vadd.f32 0.0, %v1530
          %v1532 = vpop.f32.mrf.mxu0
          %v1533 = vadd.f32 0.0, %v1532
          %1534 = vdwg.mxu0
          %v1535 = vpack.c.bf16 %v1381, %v1377
          %v1536 = vpack.c.bf16 %v1383, %v1379
          %v1537 = vpack.c.bf16 %v1391, %v1387
          %v1538 = vpack.c.bf16 %v1393, %v1389
          %v1539 = vpack.c.bf16 %v1401, %v1397
          %v1540 = vpack.c.bf16 %v1403, %v1399
          %v1541 = vpack.c.bf16 %v1411, %v1407
          %v1542 = vpack.c.bf16 %v1413, %v1409
          %v1543 = vpack.c.bf16 %v1421, %v1417
          %v1544 = vpack.c.bf16 %v1423, %v1419
          %v1545 = vpack.c.bf16 %v1431, %v1427
          %v1546 = vpack.c.bf16 %v1433, %v1429
          %v1547 = vpack.c.bf16 %v1441, %v1437
          %v1548 = vpack.c.bf16 %v1443, %v1439
          %v1549 = vpack.c.bf16 %v1451, %v1447
          %v1550 = vpack.c.bf16 %v1453, %v1449
          %v1551 = vpack.c.bf16 %v1461, %v1457
          %v1552 = vpack.c.bf16 %v1463, %v1459
          %v1553 = vpack.c.bf16 %v1471, %v1467
          %v1554 = vpack.c.bf16 %v1473, %v1469
          %v1555 = vpack.c.bf16 %v1481, %v1477
          %v1556 = vpack.c.bf16 %v1483, %v1479
          %v1557 = vpack.c.bf16 %v1491, %v1487
          %v1558 = vpack.c.bf16 %v1493, %v1489
          %v1559 = vpack.c.bf16 %v1501, %v1497
          %v1560 = vpack.c.bf16 %v1503, %v1499
          %v1561 = vpack.c.bf16 %v1511, %v1507
          %v1562 = vpack.c.bf16 %v1513, %v1509
          %v1563 = vpack.c.bf16 %v1521, %v1517
          %v1564 = vpack.c.bf16 %v1523, %v1519
          %v1565 = vpack.c.bf16 %v1531, %v1527
          %v1566 = vpack.c.bf16 %v1533, %v1529
          %v1599 = vunpack.c.l.b16 %v1535
          %v1600 = vunpack.c.l.b16 %v1536
          %v1601 = vunpack.c.h.b16 %v1535
          %v1602 = vunpack.c.h.b16 %v1536
          %v1603 = vunpack.c.l.b16 %v1537
          %v1604 = vunpack.c.l.b16 %v1538
          %v1605 = vunpack.c.h.b16 %v1537
          %v1606 = vunpack.c.h.b16 %v1538
          %v1607 = vunpack.c.l.b16 %v1539
          %v1608 = vunpack.c.l.b16 %v1540
          %v1609 = vunpack.c.h.b16 %v1539
          %v1610 = vunpack.c.h.b16 %v1540
          %v1611 = vunpack.c.l.b16 %v1541
          %v1612 = vunpack.c.l.b16 %v1542
          %v1613 = vunpack.c.h.b16 %v1541
          %v1614 = vunpack.c.h.b16 %v1542
          %v1615 = vunpack.c.l.b16 %v1543
          %v1616 = vunpack.c.l.b16 %v1544
          %v1617 = vunpack.c.h.b16 %v1543
          %v1618 = vunpack.c.h.b16 %v1544
          %v1619 = vunpack.c.l.b16 %v1545
          %v1620 = vunpack.c.l.b16 %v1546
          %v1621 = vunpack.c.h.b16 %v1545
          %v1622 = vunpack.c.h.b16 %v1546
          %v1623 = vunpack.c.l.b16 %v1547
          %v1624 = vunpack.c.l.b16 %v1548
          %v1625 = vunpack.c.h.b16 %v1547
          %v1626 = vunpack.c.h.b16 %v1548
          %v1627 = vunpack.c.l.b16 %v1549
          %v1628 = vunpack.c.l.b16 %v1550
          %v1629 = vunpack.c.h.b16 %v1549
          %v1630 = vunpack.c.h.b16 %v1550
          %v1631 = vunpack.c.l.b16 %v1551
          %v1632 = vunpack.c.l.b16 %v1552
          %v1633 = vunpack.c.h.b16 %v1551
          %v1634 = vunpack.c.h.b16 %v1552
          %v1635 = vunpack.c.l.b16 %v1553
          %v1636 = vunpack.c.l.b16 %v1554
          %v1637 = vunpack.c.h.b16 %v1553
          %v1638 = vunpack.c.h.b16 %v1554
          %v1639 = vunpack.c.l.b16 %v1555
          %v1640 = vunpack.c.l.b16 %v1556
          %v1641 = vunpack.c.h.b16 %v1555
          %v1642 = vunpack.c.h.b16 %v1556
          %v1643 = vunpack.c.l.b16 %v1557
          %v1644 = vunpack.c.l.b16 %v1558
          %v1645 = vunpack.c.h.b16 %v1557
          %v1646 = vunpack.c.h.b16 %v1558
          %v1647 = vunpack.c.l.b16 %v1559
          %v1648 = vunpack.c.l.b16 %v1560
          %v1649 = vunpack.c.h.b16 %v1559
          %v1650 = vunpack.c.h.b16 %v1560
          %v1651 = vunpack.c.l.b16 %v1561
          %v1652 = vunpack.c.l.b16 %v1562
          %v1653 = vunpack.c.h.b16 %v1561
          %v1654 = vunpack.c.h.b16 %v1562
          %v1655 = vunpack.c.l.b16 %v1563
          %v1656 = vunpack.c.l.b16 %v1564
          %v1657 = vunpack.c.h.b16 %v1563
          %v1658 = vunpack.c.h.b16 %v1564
          %v1659 = vunpack.c.l.b16 %v1565
          %v1660 = vunpack.c.l.b16 %v1566
          %v1661 = vunpack.c.h.b16 %v1565
          %v1662 = vunpack.c.h.b16 %v1566
          %v1663 = vpack.c.b16 %v1600, %v1599
          %v1664 = vpack.c.b16 %v1602, %v1601
          %v1665 = vpack.c.b16 %v1604, %v1603
          %v1666 = vpack.c.b16 %v1606, %v1605
          %v1667 = vpack.c.b16 %v1608, %v1607
          %v1668 = vpack.c.b16 %v1610, %v1609
          %v1669 = vpack.c.b16 %v1612, %v1611
          %v1670 = vpack.c.b16 %v1614, %v1613
          %v1671 = vpack.c.b16 %v1616, %v1615
          %v1672 = vpack.c.b16 %v1618, %v1617
          %v1673 = vpack.c.b16 %v1620, %v1619
          %v1674 = vpack.c.b16 %v1622, %v1621
          %v1675 = vpack.c.b16 %v1624, %v1623
          %v1676 = vpack.c.b16 %v1626, %v1625
          %v1677 = vpack.c.b16 %v1628, %v1627
          %v1678 = vpack.c.b16 %v1630, %v1629
          %v1679 = vpack.c.b16 %v1632, %v1631
          %v1680 = vpack.c.b16 %v1634, %v1633
          %v1681 = vpack.c.b16 %v1636, %v1635
          %v1682 = vpack.c.b16 %v1638, %v1637
          %v1683 = vpack.c.b16 %v1640, %v1639
          %v1684 = vpack.c.b16 %v1642, %v1641
          %v1685 = vpack.c.b16 %v1644, %v1643
          %v1686 = vpack.c.b16 %v1646, %v1645
          %v1687 = vpack.c.b16 %v1648, %v1647
          %v1688 = vpack.c.b16 %v1650, %v1649
          %v1689 = vpack.c.b16 %v1652, %v1651
          %v1690 = vpack.c.b16 %v1654, %v1653
          %v1691 = vpack.c.b16 %v1656, %v1655
          %v1692 = vpack.c.b16 %v1658, %v1657
          %v1693 = vpack.c.b16 %v1660, %v1659
          %v1694 = vpack.c.b16 %v1662, %v1661
          %1727 = vst [vmem:[%s248] sm:$0xff] %v1663
          %1728 = vst [vmem:[%s248 + $0x8] sm:$0xff] %v1664
          %1729 = vst [vmem:[%s248 + $0x10] sm:$0xff] %v1665
          %1730 = vst [vmem:[%s248 + $0x18] sm:$0xff] %v1666
          %1731 = vst [vmem:[%s248 + $0x20] sm:$0xff] %v1667
          %1732 = vst [vmem:[%s248 + $0x28] sm:$0xff] %v1668
          %1733 = vst [vmem:[%s248 + $0x30] sm:$0xff] %v1669
          %1734 = vst [vmem:[%s248 + $0x38] sm:$0xff] %v1670
          %1735 = vst [vmem:[%s248 + $0x40] sm:$0xff] %v1671
          %1736 = vst [vmem:[%s248 + $0x48] sm:$0xff] %v1672
          %1737 = vst [vmem:[%s248 + $0x50] sm:$0xff] %v1673
          %1738 = vst [vmem:[%s248 + $0x58] sm:$0xff] %v1674
          %1739 = vst [vmem:[%s248 + $0x60] sm:$0xff] %v1675
          %1740 = vst [vmem:[%s248 + $0x68] sm:$0xff] %v1676
          %1741 = vst [vmem:[%s248 + $0x70] sm:$0xff] %v1677
          %1742 = vst [vmem:[%s248 + $0x78] sm:$0xff] %v1678
          %1743 = vst [vmem:[%s248 + $0x80] sm:$0xff] %v1679
          %1744 = vst [vmem:[%s248 + $0x88] sm:$0xff] %v1680
          %1745 = vst [vmem:[%s248 + $0x90] sm:$0xff] %v1681
          %1746 = vst [vmem:[%s248 + $0x98] sm:$0xff] %v1682
          %1747 = vst [vmem:[%s248 + $0xa0] sm:$0xff] %v1683
          %1748 = vst [vmem:[%s248 + $0xa8] sm:$0xff] %v1684
          %1749 = vst [vmem:[%s248 + $0xb0] sm:$0xff] %v1685
          %1750 = vst [vmem:[%s248 + $0xb8] sm:$0xff] %v1686
          %1751 = vst [vmem:[%s248 + $0xc0] sm:$0xff] %v1687
          %1752 = vst [vmem:[%s248 + $0xc8] sm:$0xff] %v1688
          %1753 = vst [vmem:[%s248 + $0xd0] sm:$0xff] %v1689
          %1754 = vst [vmem:[%s248 + $0xd8] sm:$0xff] %v1690
          %1755 = vst [vmem:[%s248 + $0xe0] sm:$0xff] %v1691
          %1756 = vst [vmem:[%s248 + $0xe8] sm:$0xff] %v1692
          %1757 = vst [vmem:[%s248 + $0xf0] sm:$0xff] %v1693
          %1758 = vst [vmem:[%s248 + $0xf8] sm:$0xff] %v1694
        $region48: #{tpu_custom_call.1} parent=35 // pred_fallthru
          _
        %s1759 = sand.u32 %s137, 1
        %s1760 = scalar_lea.sflag [#allocation5], %s1759
        %s1761 = sand.u32 %s137, 1
        %s1762 = smul.addr %s1761, 256
        %s1763 = scalar_lea.vmem [#allocation6], %s1762
        // Predicated region
        $region49: #{tpu_custom_call.1} parent=35 // pred_check
          %p1764 = pneg %p147
        $region50: #{tpu_custom_call.1} parent=35 // pred_check_branch
          %1766 = sbr.rel (%p1764) target = $region52
        $region51: #{tpu_custom_call.1} parent=35 // pred_region
          %s1767 = smul.u32 32, %s25
          %s1769 = ssub.s32 4096, 4096
          %1770 = vsyncadd %s1760, %s1769
          %s1771 = smul.addr %s1767, 2
          %s1772 = smul.addr %s1771, 64
          %s1773 = scalar_lea.hbm %s4, %s1772
          %s1774 = sshll.u32 %s1763, 4
          %s1775 = int_to_ptr.vmem [resolvable:$true] %s1774
          %1780 = dma.vmem_to_hbm [thread:$0]  %s1775, 4096, %s1773, %s1760, 128, 128, 8
        $region52: #{tpu_custom_call.1} parent=35 // pred_fallthru
          _
      $region36: #{tpu_custom_call.1} parent=5 // pred_fallthru
        _
      %p1781 = scmp.le.s32.totalorder 2, %s16
      // Predicated region
      $region53: #{tpu_custom_call.1} parent=5 // pred_check
        %p1782 = pneg %p1781
      $region54: #{tpu_custom_call.1} parent=5 // pred_check_branch
        %1784 = sbr.rel (%p1782) target = $region56
      $region55: #{tpu_custom_call.1} parent=5 // pred_region
        %s1785 = ssub.s32 %s16, 2
        // Predicated region
        $region57: #{tpu_custom_call.1} parent=55 // pred_check
          %p1786 = pneg %p153
        $region58: #{tpu_custom_call.1} parent=55 // pred_check_branch
          %1788 = sbr.rel (%p1786) target = $region60
        $region59: #{tpu_custom_call.1} parent=55 // pred_region
          %s1789 = sand.u32 %s138, 1
          %s1790 = scalar_lea.sflag [#allocation5], %s1789
          %s1791 = sand.u32 %s138, 1
          %s1792 = smul.addr %s1791, 256
          %s1793 = scalar_lea.vmem [#allocation6], %s1792
          %1794 = dma.done %s1790, 4096
        $region60: #{tpu_custom_call.1} parent=55 // pred_fallthru
          _
      $region56: #{tpu_custom_call.1} parent=5 // pred_fallthru
        _
    $region6: #{tpu_custom_call.1} parent=1 // loop_footer
      %s20 = sadd.s32 1, %s16
    $region7: #{tpu_custom_call.1} parent=1 // loop_footer_branch
      %15 = sbr.rel target = $region3
    $region8: #{tpu_custom_call.1} parent=1 // loop_exit
      _
    %1795 = vsyncpa [#allocation4], 1
    %s1796 = scalar_lea.sflag [#allocation4], 1
    %1797 = vsyncpa %s1796, 1
    %1798 = vsyncpa [#allocation5], 1
    %s1799 = scalar_lea.sflag [#allocation5], 1
    %1800 = vsyncpa %s1799, 1

</llo_original>
